<compile_context>
chip_gen: v7x
topology: tpu7x:2x2x1
jax: 0.10.0
libtpu: 0.0.40
codegen_flags: <defaults>
</compile_context>

<pallas_src>
import functools

import jax
import jax.numpy as jnp
from jax import lax
from jax.experimental import pallas as pl
from jax.experimental.pallas import tpu as pltpu


def _upblock_kernel(xp_ref, w_ref, o_ref, band_ref):
    """One (image, row-tile) step computing all four output parities (ph, pw).

    xp_ref  : (1, H+2, W+2, Cin)      bf16 halo-padded NHWC image (constant over h)
    w_ref   : (2, 2, 2, 2*Cin, Cout)  bf16 packed taps, indexed [ph, dh, pw]
    o_ref   : (1, TH, 2, W, 2*Cout)   output tile; dim 2 = row parity, last = (pw, c)
    band_ref: ((TH+2)*W, 3*Cin)       VMEM scratch: 3 column-shifted im2col bands
    """
    TH = o_ref.shape[1]
    W = o_ref.shape[3]
    Cin = xp_ref.shape[3]
    Cout = w_ref.shape[4]
    h = pl.program_id(1)
    r0 = pl.multiple_of(h * TH, TH)          # first padded input row of this tile

    # --- gather phase: 3 column-shifted bands, built ONCE, shared by all 4
    # parities (row shifts become contiguous row-slices of the slab below).
    for dw in range(3):                                        # static unroll
        band = xp_ref[0, pl.ds(r0, TH + 2), dw:dw + W, :]      # (TH+2, W, Cin)
        band_ref[:, dw * Cin:(dw + 1) * Cin] = band.reshape((TH + 2) * W, Cin)

    # --- matmul phase: 8 MXU dots of K=2*Cin, f32 accumulation, zero padded-K
    # rows. For output (ph, pw): sum over row taps dh of
    #   slab[(ph+dh)*W : (ph+dh)*W + TH*W, pw*Cin : (pw+2)*Cin] @ w[ph, dh, pw]
    for ph in range(2):                       # output row parity
        for pw in range(2):                   # output column parity
            acc = None
            for dh in range(2):               # row tap
                lhs = band_ref[(ph + dh) * W:(ph + dh) * W + TH * W,
                               pw * Cin:(pw + 2) * Cin]        # (TH*W, 2*Cin)
                part = jnp.dot(lhs, w_ref[ph, dh, pw],
                               preferred_element_type=jnp.float32)
                acc = part if acc is None else acc + part
            res = jnp.maximum(acc, 0.0).astype(o_ref.dtype)    # fused ReLU
            o_ref[0, :, ph, :, pw * Cout:(pw + 1) * Cout] = (
                res.reshape(TH, W, Cout))


def _pack_weight(weight, cdt):
    """Permute PyTorch ConvTranspose2d taps [Cin, Cout, 4, 4] into
    w_packed[ph, dh, pw, tw*Cin + ic, c] = weight[ic, c, 3-ph-2*dh, 3-pw-2*tw]
    with one flip + reshape + transpose (no per-tap dynamic-update-slice passes).
    """
    Cin, Cout = weight.shape[0], weight.shape[1]
    wf = weight.astype(cdt)[:, :, ::-1, ::-1]        # wf[ic,c,a,b] = w[ic,c,3-a,3-b]
    wf = wf.reshape(Cin, Cout, 2, 2, 2, 2)           # (ic, c, dh, ph, tw, pw)
    wf = wf.transpose(3, 2, 5, 4, 0, 1)              # (ph, dh, pw, tw, ic, c)
    return wf.reshape(2, 2, 2, 2 * Cin, Cout)


@functools.partial(jax.jit, static_argnames=("out_dtype", "row_tile"))
def upblock_forward(x_nchw, weight, *, out_dtype=jnp.bfloat16, row_tile=None):
    """ConvTranspose2d(k=4, s=2, p=1, bias=False) + ReLU (PyTorch semantics).

    x_nchw : [N, Cin, H, W]     (PyTorch layout)
    weight : [Cin, Cout, 4, 4]  (PyTorch ConvTranspose2d weight layout)
    returns: [N, Cout, 2H, 2W]  in `out_dtype` (default bfloat16 to halve the 4x-
             upsampled HBM writeback). Compute is bf16 x bf16 with f32 accumulation.
    """
    N, Cin, H, W = x_nchw.shape
    Cout = weight.shape[1]
    cdt = jnp.bfloat16                      # MXU-native operand dtype

    if row_tile is None:
        row_tile = 8 if (H % 8 == 0 and H >= 8) else H
    TH = row_tile
    assert H % TH == 0, "row_tile must divide H"

    # glue: NCHW->NHWC + bf16 cast + 1px halo pad (fuses into one XLA pass)
    x_nhwc = jnp.transpose(x_nchw, (0, 2, 3, 1)).astype(cdt)
    x_pad = jnp.pad(x_nhwc, ((0, 0), (1, 1), (1, 1), (0, 0)))   # [N, H+2, W+2, Cin]

    w_packed = _pack_weight(weight, cdt)                        # [2,2,2,2Cin,Cout]

    out = pl.pallas_call(
        _upblock_kernel,
        out_shape=jax.ShapeDtypeStruct((N, H, 2, W, 2 * Cout), out_dtype),
        grid=(N, H // TH),
        in_specs=[
            # whole padded image; index constant across row-tiles -> fetched once
            pl.BlockSpec((1, H + 2, W + 2, Cin), lambda n, h: (n, 0, 0, 0)),
            # packed taps resident for the whole grid (constant index map)
            pl.BlockSpec((2, 2, 2, 2 * Cin, Cout), lambda n, h: (0, 0, 0, 0, 0)),
        ],
        out_specs=pl.BlockSpec((1, TH, 2, W, 2 * Cout),
                               lambda n, h: (n, h, 0, 0, 0)),
        scratch_shapes=[pltpu.VMEM(((TH + 2) * W, 3 * Cin), cdt)],
        compiler_params=pltpu.CompilerParams(
            dimension_semantics=("parallel", "parallel"),
            vmem_limit_bytes=64 * 1024 * 1024),
    )(x_pad, w_packed)

    # glue: parity interleave is pure adjacent-dim merges (free), then back to NCHW.
    # out index order (n, m, ph, j, pw, c) -> y[n, 2m+ph, 2j+pw, c]
    out = out.reshape(N, 2 * H, 2 * W, Cout)                    # NHWC
    return jnp.transpose(out, (0, 3, 1, 2))                     # NCHW


def _reference(x_nchw, weight):
    """Pure-JAX reference: ConvTranspose2d == lhs-dilated conv with flipped kernel."""
    w_oihw = jnp.transpose(weight, (1, 0, 2, 3))[:, :, ::-1, ::-1]
    y = lax.conv_general_dilated(
        x_nchw, w_oihw,
        window_strides=(1, 1),
        padding=[(2, 2), (2, 2)],
        lhs_dilation=(2, 2),
        dimension_numbers=("NCHW", "OIHW", "NCHW"),
    )
    return jnp.maximum(y, 0.0)


if __name__ == "__main__":
    # Small deterministic shapes (correctness-only): batch=2, Cin=4, Cout=8, 16x16.
    N, Cin, Cout, H, W = 2, 4, 8, 16, 16

    key = jax.random.PRNGKey(0)
    kx, kw = jax.random.split(key)
    x = jax.random.normal(kx, (N, Cin, H, W), dtype=jnp.float32)
    # PyTorch ConvTranspose2d weight shape: [in_channels, out_channels, kH, kW]
    weight = jax.random.normal(kw, (Cin, Cout, 4, 4), dtype=jnp.float32) * 0.1

    out = jax.block_until_ready(upblock_forward(x, weight))

    # Reference on the same bf16-quantized operands (kernel computes bf16 x bf16
    # with f32 accumulation and stores bf16), so differences are bf16 rounding only.
    xq = x.astype(jnp.bfloat16).astype(jnp.float32)
    wq = weight.astype(jnp.bfloat16).astype(jnp.float32)
    ref = _reference(xq, wq)

    assert out.shape == (N, Cout, 2 * H, 2 * W), out.shape
    out_f32 = out.astype(jnp.float32)
    if not jnp.allclose(out_f32, ref, atol=2e-2, rtol=2e-2):
        max_err = jnp.max(jnp.abs(out_f32 - ref))
        raise AssertionError(
            f"Pallas UpBlock output mismatch vs reference (max abs err {max_err})")

    print("KERNEL_OK")
</pallas_src>

<mosaic_0001>
module attributes {stable_mosaic.version = 11 : i64} {
  func.func @_upblock_kernel(%arg0: i32, %arg1: i32, %arg2: memref<1x18x18x4xbf16, #tpu.memory_space<vmem>>, %arg3: memref<2x2x2x8x8xbf16, #tpu.memory_space<vmem>>, %arg4: memref<1x8x2x16x16xbf16, #tpu.memory_space<vmem>>, %arg5: memref<160x12xbf16, #tpu.memory_space<vmem>>) attributes {dimension_semantics = [#tpu.dimension_semantics<parallel>, #tpu.dimension_semantics<parallel>], iteration_bounds = array<i64: 2, 2>, scalar_prefetch = 0 : i64, scratch_operands = 1 : i64, tpu.core_type = #tpu.core_type<tc>, window_params = [{transform_indices = @transform_0, window_bounds = array<i64: 1, 18, 18, 4>}, {pipeline_mode = #tpu.pipeline_mode<synchronous>, transform_indices = @transform_1, window_bounds = array<i64: 2, 2, 2, 8, 8>}, {transform_indices = @transform_2, window_bounds = array<i64: 1, 8, 2, 16, 16>}]} {
    %c8_i32 = arith.constant 8 : i32
    %0 = arith.muli %arg1, %c8_i32 : i32
    %1 = tpu.assume_multiple %0, 8 : i32
    %c0 = arith.constant 0 : index
    %2 = arith.index_cast %1 : i32 to index
    %c0_0 = arith.constant 0 : index
    %c0_1 = arith.constant 0 : index
    %3 = vector.load %arg2[%c0, %2, %c0_0, %c0_1] : memref<1x18x18x4xbf16, #tpu.memory_space<vmem>>, vector<1x10x16x4xbf16>
    %4 = vector.shape_cast %3 : vector<1x10x16x4xbf16> to vector<10x16x4xbf16>
    %5 = vector.shape_cast %4 : vector<10x16x4xbf16> to vector<160x4xbf16>
    %c0_2 = arith.constant 0 : index
    %c0_3 = arith.constant 0 : index
    %6 = vector.load %arg5[%c0_2, %c0_3] : memref<160x12xbf16, #tpu.memory_space<vmem>>, vector<160x4xbf16>
    tpu.vector_store %arg5[%c0_2, %c0_3], %5 {strides = array<i32>} : memref<160x12xbf16, #tpu.memory_space<vmem>>, vector<160x4xbf16>,
    %c0_4 = arith.constant 0 : index
    %7 = arith.index_cast %1 : i32 to index
    %c1 = arith.constant 1 : index
    %c0_5 = arith.constant 0 : index
    %8 = vector.load %arg2[%c0_4, %7, %c1, %c0_5] : memref<1x18x18x4xbf16, #tpu.memory_space<vmem>>, vector<1x10x16x4xbf16>
    %9 = vector.shape_cast %8 : vector<1x10x16x4xbf16> to vector<10x16x4xbf16>
    %10 = vector.shape_cast %9 : vector<10x16x4xbf16> to vector<160x4xbf16>
    %c0_6 = arith.constant 0 : index
    %c4 = arith.constant 4 : index
    %11 = vector.load %arg5[%c0_6, %c4] : memref<160x12xbf16, #tpu.memory_space<vmem>>, vector<160x4xbf16>
    tpu.vector_store %arg5[%c0_6, %c4], %10 {strides = array<i32>} : memref<160x12xbf16, #tpu.memory_space<vmem>>, vector<160x4xbf16>,
    %c0_7 = arith.constant 0 : index
    %12 = arith.index_cast %1 : i32 to index
    %c2 = arith.constant 2 : index
    %c0_8 = arith.constant 0 : index
    %13 = vector.load %arg2[%c0_7, %12, %c2, %c0_8] : memref<1x18x18x4xbf16, #tpu.memory_space<vmem>>, vector<1x10x16x4xbf16>
    %14 = vector.shape_cast %13 : vector<1x10x16x4xbf16> to vector<10x16x4xbf16>
    %15 = vector.shape_cast %14 : vector<10x16x4xbf16> to vector<160x4xbf16>
    %c0_9 = arith.constant 0 : index
    %c8 = arith.constant 8 : index
    %16 = vector.load %arg5[%c0_9, %c8] : memref<160x12xbf16, #tpu.memory_space<vmem>>, vector<160x4xbf16>
    tpu.vector_store %arg5[%c0_9, %c8], %15 {strides = array<i32>} : memref<160x12xbf16, #tpu.memory_space<vmem>>, vector<160x4xbf16>,
    %c0_10 = arith.constant 0 : index
    %c0_11 = arith.constant 0 : index
    %17 = vector.load %arg5[%c0_10, %c0_11] : memref<160x12xbf16, #tpu.memory_space<vmem>>, vector<128x8xbf16>
    %c0_12 = arith.constant 0 : index
    %c0_13 = arith.constant 0 : index
    %c0_14 = arith.constant 0 : index
    %c0_15 = arith.constant 0 : index
    %c0_16 = arith.constant 0 : index
    %18 = vector.load %arg3[%c0_12, %c0_13, %c0_14, %c0_15, %c0_16] : memref<2x2x2x8x8xbf16, #tpu.memory_space<vmem>>, vector<1x1x1x8x8xbf16>
    %19 = vector.shape_cast %18 : vector<1x1x1x8x8xbf16> to vector<8x8xbf16>
    %cst = arith.constant dense<0.000000e+00> : vector<128x8xf32>
    %20 = tpu.matmul %17, %19, %cst {dimension_numbers = #tpu.dot_dimension_numbers<[1], [0], [0], [1], [0, 0, 1, 1], [], []>} : vector<128x8xbf16>, vector<8x8xbf16>, vector<128x8xf32> -> vector<128x8xf32>
    %c16 = arith.constant 16 : index
    %c0_17 = arith.constant 0 : index
    %21 = vector.load %arg5[%c16, %c0_17] : memref<160x12xbf16, #tpu.memory_space<vmem>>, vector<128x8xbf16>
    %c0_18 = arith.constant 0 : index
    %c1_19 = arith.constant 1 : index
    %c0_20 = arith.constant 0 : index
    %c0_21 = arith.constant 0 : index
    %c0_22 = arith.constant 0 : index
    %22 = vector.load %arg3[%c0_18, %c1_19, %c0_20, %c0_21, %c0_22] : memref<2x2x2x8x8xbf16, #tpu.memory_space<vmem>>, vector<1x1x1x8x8xbf16>
    %23 = vector.shape_cast %22 : vector<1x1x1x8x8xbf16> to vector<8x8xbf16>
    %cst_23 = arith.constant dense<0.000000e+00> : vector<128x8xf32>
    %24 = tpu.matmul %21, %23, %cst_23 {dimension_numbers = #tpu.dot_dimension_numbers<[1], [0], [0], [1], [0, 0, 1, 1], [], []>} : vector<128x8xbf16>, vector<8x8xbf16>, vector<128x8xf32> -> vector<128x8xf32>
    %25 = arith.addf %20, %24 : vector<128x8xf32>
    %cst_24 = arith.constant 0.000000e+00 : f32
    %26 = vector.broadcast %cst_24 : f32 to vector<128x8xf32>
    %27 = arith.maximumf %25, %26 : vector<128x8xf32>
    %28 = arith.truncf %27 : vector<128x8xf32> to vector<128x8xbf16>
    %29 = vector.shape_cast %28 : vector<128x8xbf16> to vector<8x16x8xbf16>
    %c0_25 = arith.constant 0 : index
    %c0_26 = arith.constant 0 : index
    %c0_27 = arith.constant 0 : index
    %c0_28 = arith.constant 0 : index
    %c0_29 = arith.constant 0 : index
    %30 = vector.load %arg4[%c0_25, %c0_26, %c0_27, %c0_28, %c0_29] : memref<1x8x2x16x16xbf16, #tpu.memory_space<vmem>>, vector<1x8x1x16x8xbf16>
    %31 = vector.shape_cast %30 : vector<1x8x1x16x8xbf16> to vector<8x16x8xbf16>
    %32 = vector.shape_cast %29 : vector<8x16x8xbf16> to vector<1x8x1x16x8xbf16>
    tpu.vector_store %arg4[%c0_25, %c0_26, %c0_27, %c0_28, %c0_29], %32 {strides = array<i32>} : memref<1x8x2x16x16xbf16, #tpu.memory_space<vmem>>, vector<1x8x1x16x8xbf16>,
    %c0_30 = arith.constant 0 : index
    %c4_31 = arith.constant 4 : index
    %33 = vector.load %arg5[%c0_30, %c4_31] : memref<160x12xbf16, #tpu.memory_space<vmem>>, vector<128x8xbf16>
    %c0_32 = arith.constant 0 : index
    %c0_33 = arith.constant 0 : index
    %c1_34 = arith.constant 1 : index
    %c0_35 = arith.constant 0 : index
    %c0_36 = arith.constant 0 : index
    %34 = vector.load %arg3[%c0_32, %c0_33, %c1_34, %c0_35, %c0_36] : memref<2x2x2x8x8xbf16, #tpu.memory_space<vmem>>, vector<1x1x1x8x8xbf16>
    %35 = vector.shape_cast %34 : vector<1x1x1x8x8xbf16> to vector<8x8xbf16>
    %cst_37 = arith.constant dense<0.000000e+00> : vector<128x8xf32>
    %36 = tpu.matmul %33, %35, %cst_37 {dimension_numbers = #tpu.dot_dimension_numbers<[1], [0], [0], [1], [0, 0, 1, 1], [], []>} : vector<128x8xbf16>, vector<8x8xbf16>, vector<128x8xf32> -> vector<128x8xf32>
    %c16_38 = arith.constant 16 : index
    %c4_39 = arith.constant 4 : index
    %37 = vector.load %arg5[%c16_38, %c4_39] : memref<160x12xbf16, #tpu.memory_space<vmem>>, vector<128x8xbf16>
    %c0_40 = arith.constant 0 : index
    %c1_41 = arith.constant 1 : index
    %c1_42 = arith.constant 1 : index
    %c0_43 = arith.constant 0 : index
    %c0_44 = arith.constant 0 : index
    %38 = vector.load %arg3[%c0_40, %c1_41, %c1_42, %c0_43, %c0_44] : memref<2x2x2x8x8xbf16, #tpu.memory_space<vmem>>, vector<1x1x1x8x8xbf16>
    %39 = vector.shape_cast %38 : vector<1x1x1x8x8xbf16> to vector<8x8xbf16>
    %cst_45 = arith.constant dense<0.000000e+00> : vector<128x8xf32>
    %40 = tpu.matmul %37, %39, %cst_45 {dimension_numbers = #tpu.dot_dimension_numbers<[1], [0], [0], [1], [0, 0, 1, 1], [], []>} : vector<128x8xbf16>, vector<8x8xbf16>, vector<128x8xf32> -> vector<128x8xf32>
    %41 = arith.addf %36, %40 : vector<128x8xf32>
    %cst_46 = arith.constant 0.000000e+00 : f32
    %42 = vector.broadcast %cst_46 : f32 to vector<128x8xf32>
    %43 = arith.maximumf %41, %42 : vector<128x8xf32>
    %44 = arith.truncf %43 : vector<128x8xf32> to vector<128x8xbf16>
    %45 = vector.shape_cast %44 : vector<128x8xbf16> to vector<8x16x8xbf16>
    %c0_47 = arith.constant 0 : index
    %c0_48 = arith.constant 0 : index
    %c0_49 = arith.constant 0 : index
    %c0_50 = arith.constant 0 : index
    %c8_51 = arith.constant 8 : index
    %46 = vector.load %arg4[%c0_47, %c0_48, %c0_49, %c0_50, %c8_51] : memref<1x8x2x16x16xbf16, #tpu.memory_space<vmem>>, vector<1x8x1x16x8xbf16>
    %47 = vector.shape_cast %46 : vector<1x8x1x16x8xbf16> to vector<8x16x8xbf16>
    %48 = vector.shape_cast %45 : vector<8x16x8xbf16> to vector<1x8x1x16x8xbf16>
    tpu.vector_store %arg4[%c0_47, %c0_48, %c0_49, %c0_50, %c8_51], %48 {strides = array<i32>} : memref<1x8x2x16x16xbf16, #tpu.memory_space<vmem>>, vector<1x8x1x16x8xbf16>,
    %c16_52 = arith.constant 16 : index
    %c0_53 = arith.constant 0 : index
    %49 = vector.load %arg5[%c16_52, %c0_53] : memref<160x12xbf16, #tpu.memory_space<vmem>>, vector<128x8xbf16>
    %c1_54 = arith.constant 1 : index
    %c0_55 = arith.constant 0 : index
    %c0_56 = arith.constant 0 : index
    %c0_57 = arith.constant 0 : index
    %c0_58 = arith.constant 0 : index
    %50 = vector.load %arg3[%c1_54, %c0_55, %c0_56, %c0_57, %c0_58] : memref<2x2x2x8x8xbf16, #tpu.memory_space<vmem>>, vector<1x1x1x8x8xbf16>
    %51 = vector.shape_cast %50 : vector<1x1x1x8x8xbf16> to vector<8x8xbf16>
    %cst_59 = arith.constant dense<0.000000e+00> : vector<128x8xf32>
    %52 = tpu.matmul %49, %51, %cst_59 {dimension_numbers = #tpu.dot_dimension_numbers<[1], [0], [0], [1], [0, 0, 1, 1], [], []>} : vector<128x8xbf16>, vector<8x8xbf16>, vector<128x8xf32> -> vector<128x8xf32>
    %c32 = arith.constant 32 : index
    %c0_60 = arith.constant 0 : index
    %53 = vector.load %arg5[%c32, %c0_60] : memref<160x12xbf16, #tpu.memory_space<vmem>>, vector<128x8xbf16>
    %c1_61 = arith.constant 1 : index
    %c1_62 = arith.constant 1 : index
    %c0_63 = arith.constant 0 : index
    %c0_64 = arith.constant 0 : index
    %c0_65 = arith.constant 0 : index
    %54 = vector.load %arg3[%c1_61, %c1_62, %c0_63, %c0_64, %c0_65] : memref<2x2x2x8x8xbf16, #tpu.memory_space<vmem>>, vector<1x1x1x8x8xbf16>
    %55 = vector.shape_cast %54 : vector<1x1x1x8x8xbf16> to vector<8x8xbf16>
    %cst_66 = arith.constant dense<0.000000e+00> : vector<128x8xf32>
    %56 = tpu.matmul %53, %55, %cst_66 {dimension_numbers = #tpu.dot_dimension_numbers<[1], [0], [0], [1], [0, 0, 1, 1], [], []>} : vector<128x8xbf16>, vector<8x8xbf16>, vector<128x8xf32> -> vector<128x8xf32>
    %57 = arith.addf %52, %56 : vector<128x8xf32>
    %cst_67 = arith.constant 0.000000e+00 : f32
    %58 = vector.broadcast %cst_67 : f32 to vector<128x8xf32>
    %59 = arith.maximumf %57, %58 : vector<128x8xf32>
    %60 = arith.truncf %59 : vector<128x8xf32> to vector<128x8xbf16>
    %61 = vector.shape_cast %60 : vector<128x8xbf16> to vector<8x16x8xbf16>
    %c0_68 = arith.constant 0 : index
    %c0_69 = arith.constant 0 : index
    %c1_70 = arith.constant 1 : index
    %c0_71 = arith.constant 0 : index
    %c0_72 = arith.constant 0 : index
    %62 = vector.load %arg4[%c0_68, %c0_69, %c1_70, %c0_71, %c0_72] : memref<1x8x2x16x16xbf16, #tpu.memory_space<vmem>>, vector<1x8x1x16x8xbf16>
    %63 = vector.shape_cast %62 : vector<1x8x1x16x8xbf16> to vector<8x16x8xbf16>
    %64 = vector.shape_cast %61 : vector<8x16x8xbf16> to vector<1x8x1x16x8xbf16>
    tpu.vector_store %arg4[%c0_68, %c0_69, %c1_70, %c0_71, %c0_72], %64 {strides = array<i32>} : memref<1x8x2x16x16xbf16, #tpu.memory_space<vmem>>, vector<1x8x1x16x8xbf16>,
    %c16_73 = arith.constant 16 : index
    %c4_74 = arith.constant 4 : index
    %65 = vector.load %arg5[%c16_73, %c4_74] : memref<160x12xbf16, #tpu.memory_space<vmem>>, vector<128x8xbf16>
    %c1_75 = arith.constant 1 : index
    %c0_76 = arith.constant 0 : index
    %c1_77 = arith.constant 1 : index
    %c0_78 = arith.constant 0 : index
    %c0_79 = arith.constant 0 : index
    %66 = vector.load %arg3[%c1_75, %c0_76, %c1_77, %c0_78, %c0_79] : memref<2x2x2x8x8xbf16, #tpu.memory_space<vmem>>, vector<1x1x1x8x8xbf16>
    %67 = vector.shape_cast %66 : vector<1x1x1x8x8xbf16> to vector<8x8xbf16>
    %cst_80 = arith.constant dense<0.000000e+00> : vector<128x8xf32>
    %68 = tpu.matmul %65, %67, %cst_80 {dimension_numbers = #tpu.dot_dimension_numbers<[1], [0], [0], [1], [0, 0, 1, 1], [], []>} : vector<128x8xbf16>, vector<8x8xbf16>, vector<128x8xf32> -> vector<128x8xf32>
    %c32_81 = arith.constant 32 : index
    %c4_82 = arith.constant 4 : index
    %69 = vector.load %arg5[%c32_81, %c4_82] : memref<160x12xbf16, #tpu.memory_space<vmem>>, vector<128x8xbf16>
    %c1_83 = arith.constant 1 : index
    %c1_84 = arith.constant 1 : index
    %c1_85 = arith.constant 1 : index
    %c0_86 = arith.constant 0 : index
    %c0_87 = arith.constant 0 : index
    %70 = vector.load %arg3[%c1_83, %c1_84, %c1_85, %c0_86, %c0_87] : memref<2x2x2x8x8xbf16, #tpu.memory_space<vmem>>, vector<1x1x1x8x8xbf16>
    %71 = vector.shape_cast %70 : vector<1x1x1x8x8xbf16> to vector<8x8xbf16>
    %cst_88 = arith.constant dense<0.000000e+00> : vector<128x8xf32>
    %72 = tpu.matmul %69, %71, %cst_88 {dimension_numbers = #tpu.dot_dimension_numbers<[1], [0], [0], [1], [0, 0, 1, 1], [], []>} : vector<128x8xbf16>, vector<8x8xbf16>, vector<128x8xf32> -> vector<128x8xf32>
    %73 = arith.addf %68, %72 : vector<128x8xf32>
    %cst_89 = arith.constant 0.000000e+00 : f32
    %74 = vector.broadcast %cst_89 : f32 to vector<128x8xf32>
    %75 = arith.maximumf %73, %74 : vector<128x8xf32>
    %76 = arith.truncf %75 : vector<128x8xf32> to vector<128x8xbf16>
    %77 = vector.shape_cast %76 : vector<128x8xbf16> to vector<8x16x8xbf16>
    %c0_90 = arith.constant 0 : index
    %c0_91 = arith.constant 0 : index
    %c1_92 = arith.constant 1 : index
    %c0_93 = arith.constant 0 : index
    %c8_94 = arith.constant 8 : index
    %78 = vector.load %arg4[%c0_90, %c0_91, %c1_92, %c0_93, %c8_94] : memref<1x8x2x16x16xbf16, #tpu.memory_space<vmem>>, vector<1x8x1x16x8xbf16>
    %79 = vector.shape_cast %78 : vector<1x8x1x16x8xbf16> to vector<8x16x8xbf16>
    %80 = vector.shape_cast %77 : vector<8x16x8xbf16> to vector<1x8x1x16x8xbf16>
    tpu.vector_store %arg4[%c0_90, %c0_91, %c1_92, %c0_93, %c8_94], %80 {strides = array<i32>} : memref<1x8x2x16x16xbf16, #tpu.memory_space<vmem>>, vector<1x8x1x16x8xbf16>,
    return
  }
  func.func @transform_0(%arg0: i32, %arg1: i32) -> (i32, i32, i32, i32) {
    %c0_i32 = arith.constant 0 : i32
    %c0_i32_0 = arith.constant 0 : i32
    %c0_i32_1 = arith.constant 0 : i32
    %c0_i32_2 = arith.constant 0 : i32
    return %arg0, %c0_i32, %c0_i32_0, %c0_i32_1 : i32, i32, i32, i32
  }
  func.func @transform_1(%arg0: i32, %arg1: i32) -> (i32, i32, i32, i32, i32) {
    %c0_i32 = arith.constant 0 : i32
    %c0_i32_0 = arith.constant 0 : i32
    %c0_i32_1 = arith.constant 0 : i32
    %c0_i32_2 = arith.constant 0 : i32
    %c0_i32_3 = arith.constant 0 : i32
    %c0_i32_4 = arith.constant 0 : i32
    return %c0_i32, %c0_i32_0, %c0_i32_1, %c0_i32_2, %c0_i32_3 : i32, i32, i32, i32, i32
  }
  func.func @transform_2(%arg0: i32, %arg1: i32) -> (i32, i32, i32, i32, i32) {
    %c0_i32 = arith.constant 0 : i32
    %c0_i32_0 = arith.constant 0 : i32
    %c0_i32_1 = arith.constant 0 : i32
    %c0_i32_2 = arith.constant 0 : i32
    return %arg0, %arg1, %c0_i32, %c0_i32_0, %c0_i32_1 : i32, i32, i32, i32, i32
  }
}

</mosaic_0001>

<llo_original>
// kernel: upblock_forward.1
$region0: #{upblock_forward.1}
  #allocation0 [shape = 'u32[]', space=smem, size = 0x4, offset = 0x4, fixed_abs, tag = 'smem constant byte address 0x4 - core index']
  #allocation1 [shape = 'u32[144,128]{1,0:T(1,128)}', space=vmem, size = 0x12000, scoped, tag = 'internal scratch']
  #allocation2 [shape = 'bf16[160,12]{1,0:T(16,128)(2,1)}', space=vmem, size = 0xa000, scoped, tag = 'scratch operand']
  %s0 = inlined_call_operand.hbm [shape: bf16[2,18,18,4], index: 0, kind: input, shape index: {}]
  %s1 = inlined_call_operand.hbm [shape: bf16[2,2,2,8,8], index: 1, kind: input, shape index: {}]
  %s2 = inlined_call_operand.hbm [shape: bf16[2,16,2,16,16], index: 2, kind: output, shape index: {}]
  %s3 = sld [smem:[#allocation0]]
  $region49: #{upblock_forward.1} parent=0
    _
  %s5 = ssub.s32 1, %s3
  %s6 = scalar_select 0, %s5, %s3
  $region1: #{upblock_forward.1} parent=0
    #allocation3 [shape = 'u8[221184]{0}', space=vmem, size = 0x36000, scoped, tag = 'input window, operand 0']
    #allocation4 [shape = 's32[2]{0}', space=sflag, size = 0x8, scoped, tag = 'scoped memory for upblock_forward.1']
    #allocation5 [shape = 's32[2]{0}', space=sflag, size = 0x8, scoped, tag = 'scoped memory for upblock_forward.1']
    #allocation6 [shape = 'u8[16384]{0}', space=vmem, size = 0x4000, scoped, tag = 'input window, operand 1, single buffered']
    #allocation7 [shape = 's32[1]{0}', space=sflag, size = 0x4, scoped, tag = 'scoped memory for upblock_forward.1']
    #allocation8 [shape = 'u8[131072]{0}', space=vmem, size = 0x20000, scoped, tag = 'output window, operand 0']
    %7 = vsyncpa [#allocation4], 0
    %s8 = scalar_lea.sflag [#allocation4], 1
    %9 = vsyncpa %s8, 0
    %10 = vsyncpa [#allocation7], 0
    %11 = vsyncpa [#allocation5], 0
    %s12 = scalar_lea.sflag [#allocation5], 1
    %13 = vsyncpa %s12, 0
    loop: start=0, step=1, limit=6
    $region2: #{upblock_forward.1} parent=1 // loop_pre_header
      _
    $region3: #{upblock_forward.1} parent=1 // loop_header
      %s15 = sphi 0, %s19
      %p16 = scmp.ge.s32.totalorder %s15, 6
      %s22 = sphi 0, %s34
      %s23 = sphi 0, %s30
      %s24 = sphi 0, %s22
      %s25 = sphi 0, %s23
      %s26 = sphi 0, %s24
      %s27 = sphi 0, %s25
      %s37 = sphi 0, %s39
      %s40 = sphi 0, %s37
      %s41 = sphi 0, %s40
      %s57 = sphi 0, %s41
      %s61 = sphi 0, %s61
      %s63 = sphi 0, %s61
      %s64 = sphi 0, %s63
      %s78 = sphi 0, %s64
      %s86 = sphi 0, %s88
      %s89 = sphi 0, %s86
      %s90 = sphi 0, %s89
      %s106 = sphi 0, %s90
    $region4: #{upblock_forward.1} parent=1 // loop_header_branch
      %18 = sbr.rel (%p16) target = $region8
    $region5: #{upblock_forward.1} parent=1 // loop_body
      %s20 = ssub.s32 %s15, 1
      %s21 = ssub.s32 %s15, 2
      %s28 = sadd.s32 1, %s23
      %p29 = scmp.ge.s32.totalorder %s28, 2
      %s30 = scalar_select %p29, 0, %s28
      %s31 = sadd.s32 1, %s22
      %s32 = scalar_select %p29, %s31, %s22
      %p33 = scmp.ge.s32.totalorder %s32, 2
      %s34 = scalar_select %p33, 0, %s32
      %s35 = ssub.s32 %s22, %s34
      %p36 = scmp.eq.s32.totalorder %s35, 0
      %s38 = sadd.s32 %s37, 1
      %s39 = scalar_select %p36, %s37, %s38
      %p42 = pneg %p36
      %p43 = scmp.eq.s32.totalorder %s15, 3
      %p44 = por %p42, %p43
      %p45 = scmp.ne.s32.totalorder %s37, %s40
      %p46 = scmp.eq.s32.totalorder %s15, 0
      %p47 = por %p45, %p46
      %p48 = scmp.ne.s32.totalorder %s37, %s40
      %p49 = scmp.eq.s32.totalorder %s20, 3
      %p50 = por %p48, %p49
      %p51 = scmp.ne.s32.totalorder %s40, %s41
      %p52 = scmp.eq.s32.totalorder %s20, 0
      %p53 = por %p51, %p52
      %p54 = scmp.ne.s32.totalorder %s40, %s41
      %p55 = scmp.eq.s32.totalorder %s21, 3
      %p56 = por %p54, %p55
      %p58 = scmp.ne.s32.totalorder %s41, %s57
      %p59 = scmp.eq.s32.totalorder %s21, 0
      %p60 = por %p58, %p59
      %s62 = sadd.s32 %s61, 1
      %p65 = scmp.eq.s32.totalorder %s15, 3
      %p66 = scmp.ne.s32.totalorder %s61, %s63
      %p67 = scmp.eq.s32.totalorder %s15, 0
      %p68 = por %p66, %p67
      %p69 = scmp.ne.s32.totalorder %s61, %s63
      %p70 = scmp.eq.s32.totalorder %s20, 3
      %p71 = por %p69, %p70
      %p72 = scmp.ne.s32.totalorder %s63, %s64
      %p73 = scmp.eq.s32.totalorder %s20, 0
      %p74 = por %p72, %p73
      %p75 = scmp.ne.s32.totalorder %s63, %s64
      %p76 = scmp.eq.s32.totalorder %s21, 3
      %p77 = por %p75, %p76
      %p79 = scmp.ne.s32.totalorder %s64, %s78
      %p80 = scmp.eq.s32.totalorder %s21, 0
      %p81 = por %p79, %p80
      %s82 = ssub.s32 %s22, %s34
      %s83 = ssub.s32 %s23, %s30
      %s84 = sor.u32 %s82, %s83
      %p85 = scmp.eq.s32.totalorder %s84, 0
      %s87 = sadd.s32 %s86, 1
      %s88 = scalar_select %p85, %s86, %s87
      %p91 = pneg %p85
      %p92 = scmp.eq.s32.totalorder %s15, 3
      %p93 = por %p91, %p92
      %p94 = scmp.ne.s32.totalorder %s86, %s89
      %p95 = scmp.eq.s32.totalorder %s15, 0
      %p96 = por %p94, %p95
      %p97 = scmp.ne.s32.totalorder %s86, %s89
      %p98 = scmp.eq.s32.totalorder %s20, 3
      %p99 = por %p97, %p98
      %p100 = scmp.ne.s32.totalorder %s89, %s90
      %p101 = scmp.eq.s32.totalorder %s20, 0
      %p102 = por %p100, %p101
      %p103 = scmp.ne.s32.totalorder %s89, %s90
      %p104 = scmp.eq.s32.totalorder %s21, 3
      %p105 = por %p103, %p104
      %p107 = scmp.ne.s32.totalorder %s90, %s106
      %p108 = scmp.eq.s32.totalorder %s21, 0
      %p109 = por %p107, %p108
      %p110 = scmp.le.s32.totalorder 1, %s15
      %p111 = scmp.lt.s32.totalorder %s15, 5
      %p112 = pnand %p110, %p111
      %p113 = pneg %p112
      // Predicated region
      $region9: #{upblock_forward.1} parent=5 // pred_check
        _
      $region10: #{upblock_forward.1} parent=5 // pred_check_branch
        %115 = sbr.rel (%p112) target = $region12
      $region11: #{upblock_forward.1} parent=5 // pred_region
        %s116 = ssub.s32 %s15, 1
        // Predicated region
        $region13: #{upblock_forward.1} parent=11 // pred_check
          %p117 = pneg %p74
        $region14: #{upblock_forward.1} parent=11 // pred_check_branch
          %119 = sbr.rel (%p117) target = $region16
        $region15: #{upblock_forward.1} parent=11 // pred_region
          %s121 = ssub.s32 512, 512
          %122 = vsyncadd [#allocation7], %s121
          %s123 = sshll.u32 [#allocation6], 4
          %s124 = int_to_ptr.vmem [resolvable:$true] %s123
          %129 = dma.hbm_to_vmem [thread:$0]  %s1, 512, %s124, [#allocation7], 64, 64, 4
        $region16: #{upblock_forward.1} parent=11 // pred_fallthru
          _
      $region12: #{upblock_forward.1} parent=5 // pred_fallthru
        _
      %p130 = scmp.lt.s32.totalorder %s15, 4
      // Predicated region
      $region17: #{upblock_forward.1} parent=5 // pred_check
        %p131 = pneg %p130
      $region18: #{upblock_forward.1} parent=5 // pred_check_branch
        %133 = sbr.rel (%p131) target = $region20
      $region19: #{upblock_forward.1} parent=5 // pred_region
        // Predicated region
        $region21: #{upblock_forward.1} parent=19 // pred_check
          %p134 = pneg %p47
        $region22: #{upblock_forward.1} parent=19 // pred_check_branch
          %136 = sbr.rel (%p134) target = $region24
        $region23: #{upblock_forward.1} parent=19 // pred_region
          %s137 = sand.u32 %s37, 1
          %s138 = scalar_lea.sflag [#allocation4], %s137
          %s139 = sand.u32 %s37, 1
          %s140 = smul.addr %s139, 216
          %s141 = scalar_lea.vmem [#allocation3], %s140
          %s143 = ssub.s32 3456, 3456
          %144 = vsyncadd %s138, %s143
          %s145 = smul.addr %s22, 54
          %s146 = smul.addr %s145, 64
          %s147 = scalar_lea.hbm %s0, %s146
          %s148 = sshll.u32 %s141, 4
          %s149 = int_to_ptr.vmem [resolvable:$true] %s148
          %154 = dma.hbm_to_vmem [thread:$0]  %s147, 3456, %s149, %s138, 64, 64, 4
        $region24: #{upblock_forward.1} parent=19 // pred_fallthru
          _
      $region20: #{upblock_forward.1} parent=5 // pred_fallthru
        _
      %p155 = scmp.le.s32.totalorder 1, %s15
      %p156 = scmp.lt.s32.totalorder %s15, 5
      %p157 = pnand %p155, %p156
      %p158 = pneg %p157
      // Predicated region
      $region25: #{upblock_forward.1} parent=5 // pred_check
        _
      $region26: #{upblock_forward.1} parent=5 // pred_check_branch
        %160 = sbr.rel (%p157) target = $region28
      $region27: #{upblock_forward.1} parent=5 // pred_region
        %s161 = ssub.s32 %s15, 1
        %s162 = sand.u32 %s40, 1
        %s163 = scalar_lea.sflag [#allocation4], %s162
        %s164 = sand.u32 %s40, 1
        %s165 = smul.addr %s164, 216
        %s166 = scalar_lea.vmem [#allocation3], %s165
        // Predicated region
        $region29: #{upblock_forward.1} parent=27 // pred_check
          %p167 = pneg %p53
        $region30: #{upblock_forward.1} parent=27 // pred_check_branch
          %169 = sbr.rel (%p167) target = $region32
        $region31: #{upblock_forward.1} parent=27 // pred_region
          %170 = dma.done %s163, 3456
        $region32: #{upblock_forward.1} parent=27 // pred_fallthru
          _
        // Predicated region
        $region33: #{upblock_forward.1} parent=27 // pred_check
          %p171 = pneg %p74
        $region34: #{upblock_forward.1} parent=27 // pred_check_branch
          %173 = sbr.rel (%p171) target = $region36
        $region35: #{upblock_forward.1} parent=27 // pred_region
          %174 = dma.done [#allocation7], 512
        $region36: #{upblock_forward.1} parent=27 // pred_fallthru
          _
        %s175 = sand.u32 %s40, 1
        %s176 = scalar_lea.sflag [#allocation4], %s175
        %s177 = sand.u32 %s40, 1
        %s178 = smul.addr %s177, 216
        %s179 = scalar_lea.vmem [#allocation3], %s178
        %p180 = pneg %p53
        %p181 = pneg %p50
        %p182 = pneg %p74
        %p183 = pneg %p71
        %p184 = pneg %p102
        %p185 = pneg %p99
        %s186 = sand.u32 %s89, 1
        %s187 = scalar_lea.sflag [#allocation5], %s186
        %s188 = sand.u32 %s89, 1
        %s189 = smul.addr %s188, 128
        %s190 = scalar_lea.vmem [#allocation8], %s189
        %s191 = smul.u32 8, %s25
        %s193 = smul.u32 %s25, 8
        %s194 = smul.u32 %s193, 3
        %s195 = smul.addr %s194, 4
        %s196 = scalar_lea.vmem %s166, %s195 [#allocation3]
        %v197 = vld [vmem:[%s196] sm:$0xf]
        %v198 = vld [vmem:[%s196 + $0x4] sm:$0xf]
        %v199 = vld [vmem:[%s196 + $0xc] sm:$0xf]
        %v200 = vld [vmem:[%s196 + $0x10] sm:$0xf]
        %v201 = vld [vmem:[%s196 + $0x18] sm:$0xf]
        %v202 = vld [vmem:[%s196 + $0x1c] sm:$0xf]
        %v203 = vld [vmem:[%s196 + $0x24] sm:$0xf]
        %v204 = vld [vmem:[%s196 + $0x28] sm:$0xf]
        %v205 = vld [vmem:[%s196 + $0x30] sm:$0xf]
        %v206 = vld [vmem:[%s196 + $0x34] sm:$0xf]
        %v207 = vld [vmem:[%s196 + $0x3c] sm:$0xf]
        %v208 = vld [vmem:[%s196 + $0x40] sm:$0xf]
        %v209 = vld [vmem:[%s196 + $0x48] sm:$0xf]
        %v210 = vld [vmem:[%s196 + $0x4c] sm:$0xf]
        %v211 = vld [vmem:[%s196 + $0x54] sm:$0xf]
        %v212 = vld [vmem:[%s196 + $0x58] sm:$0xf]
        %v213 = vld [vmem:[%s196 + $0x60] sm:$0xf]
        %v214 = vld [vmem:[%s196 + $0x64] sm:$0xf]
        %v215 = vld [vmem:[%s196 + $0x6c] sm:$0xf]
        %v216 = vld [vmem:[%s196 + $0x70] sm:$0xf]
        %v237 = vunpack.c.l.b16 %v197
        %v238 = vunpack.c.l.b16 %v198
        %v239 = vunpack.c.l.b16 %v199
        %v240 = vunpack.c.l.b16 %v200
        %v241 = vunpack.c.l.b16 %v201
        %v242 = vunpack.c.l.b16 %v202
        %v243 = vunpack.c.l.b16 %v203
        %v244 = vunpack.c.l.b16 %v204
        %v245 = vunpack.c.l.b16 %v205
        %v246 = vunpack.c.l.b16 %v206
        %v247 = vunpack.c.l.b16 %v207
        %v248 = vunpack.c.l.b16 %v208
        %v249 = vunpack.c.l.b16 %v209
        %v250 = vunpack.c.l.b16 %v210
        %v251 = vunpack.c.l.b16 %v211
        %v252 = vunpack.c.l.b16 %v212
        %v253 = vunpack.c.l.b16 %v213
        %v254 = vunpack.c.l.b16 %v214
        %v255 = vunpack.c.l.b16 %v215
        %v256 = vunpack.c.l.b16 %v216
        %v257 = vpack.c.b16 %v238, %v237
        %v258 = vpack.c.b16 %v240, %v239
        %v259 = vpack.c.b16 %v242, %v241
        %v260 = vpack.c.b16 %v244, %v243
        %v261 = vpack.c.b16 %v246, %v245
        %v262 = vpack.c.b16 %v248, %v247
        %v263 = vpack.c.b16 %v250, %v249
        %v264 = vpack.c.b16 %v252, %v251
        %v265 = vpack.c.b16 %v254, %v253
        %v266 = vpack.c.b16 %v256, %v255
        %vm277 = vcmask 31744
        %278 = vst.msk [vmem:[#allocation2] sm:$0xff] %vm277, %v257
        %279 = vst.msk [vmem:[#allocation2 + $0x8] sm:$0xff] %vm277, %v258
        %280 = vst.msk [vmem:[#allocation2 + $0x10] sm:$0xff] %vm277, %v259
        %281 = vst.msk [vmem:[#allocation2 + $0x18] sm:$0xff] %vm277, %v260
        %282 = vst.msk [vmem:[#allocation2 + $0x20] sm:$0xff] %vm277, %v261
        %283 = vst.msk [vmem:[#allocation2 + $0x28] sm:$0xff] %vm277, %v262
        %284 = vst.msk [vmem:[#allocation2 + $0x30] sm:$0xff] %vm277, %v263
        %285 = vst.msk [vmem:[#allocation2 + $0x38] sm:$0xff] %vm277, %v264
        %286 = vst.msk [vmem:[#allocation2 + $0x40] sm:$0xff] %vm277, %v265
        %287 = vst.msk [vmem:[#allocation2 + $0x48] sm:$0xff] %vm277, %v266
        %v288 = vld [vmem:[%s196] sm:$0xf]
        %v289 = vld [vmem:[%s196 + $0x4] sm:$0xf]
        %v290 = vld [vmem:[%s196 + $0x8] sm:$0x1]
        %v291 = vld [vmem:[%s196 + $0xc] sm:$0xf]
        %v292 = vld [vmem:[%s196 + $0x10] sm:$0xf]
        %v293 = vld [vmem:[%s196 + $0x14] sm:$0x1]
        %v294 = vld [vmem:[%s196 + $0x18] sm:$0xf]
        %v295 = vld [vmem:[%s196 + $0x1c] sm:$0xf]
        %v296 = vld [vmem:[%s196 + $0x20] sm:$0x1]
        %v297 = vld [vmem:[%s196 + $0x24] sm:$0xf]
        %v298 = vld [vmem:[%s196 + $0x28] sm:$0xf]
        %v299 = vld [vmem:[%s196 + $0x2c] sm:$0x1]
        %v300 = vld [vmem:[%s196 + $0x30] sm:$0xf]
        %v301 = vld [vmem:[%s196 + $0x34] sm:$0xf]
        %v302 = vld [vmem:[%s196 + $0x38] sm:$0x1]
        %v303 = vld [vmem:[%s196 + $0x3c] sm:$0xf]
        %v304 = vld [vmem:[%s196 + $0x40] sm:$0xf]
        %v305 = vld [vmem:[%s196 + $0x44] sm:$0x1]
        %v306 = vld [vmem:[%s196 + $0x48] sm:$0xf]
        %v307 = vld [vmem:[%s196 + $0x4c] sm:$0xf]
        %v308 = vld [vmem:[%s196 + $0x50] sm:$0x1]
        %v309 = vld [vmem:[%s196 + $0x54] sm:$0xf]
        %v310 = vld [vmem:[%s196 + $0x58] sm:$0xf]
        %v311 = vld [vmem:[%s196 + $0x5c] sm:$0x1]
        %v312 = vld [vmem:[%s196 + $0x60] sm:$0xf]
        %v313 = vld [vmem:[%s196 + $0x64] sm:$0xf]
        %v314 = vld [vmem:[%s196 + $0x68] sm:$0x1]
        %v315 = vld [vmem:[%s196 + $0x6c] sm:$0xf]
        %v316 = vld [vmem:[%s196 + $0x70] sm:$0xf]
        %v317 = vld [vmem:[%s196 + $0x74] sm:$0x1]
        %vm318 = vsmask.f32 3328
        %vm319 = vsmask.f32 7440
        %vm320 = vmor %vm318, %vm319
        %v322 = vshrl.u32 %v288, 16
        %v324 = vrot.slane %v322, 4
        %v325 = vshll.u32 %v288, 16
        %v327 = vrot.slane %v325, 5
        %v328 = vor.u32 %v324, %v327
        %v329 = vrot.slane %v328, 4
        %v331 = vshll.u32 %v289, 16
        %v333 = vrot.slane %v331, 5
        %v334 = vsel %vm320, %v329, %v333
        %v335 = vshrl.u32 %v289, 16
        %v337 = vrot.slane %v335, 4
        %v338 = vor.u32 %v337, %v333
        %v339 = vrot.slane %v338, 4
        %v341 = vshll.u32 %v290, 16
        %v343 = vrot.slane %v341, 5
        %v344 = vsel %vm320, %v339, %v343
        %v346 = vshrl.u32 %v291, 16
        %v348 = vrot.slane %v346, 4
        %v349 = vshll.u32 %v291, 16
        %v351 = vrot.slane %v349, 5
        %v352 = vor.u32 %v348, %v351
        %v353 = vrot.slane %v352, 4
        %v355 = vshll.u32 %v292, 16
        %v357 = vrot.slane %v355, 5
        %v358 = vsel %vm320, %v353, %v357
        %v359 = vshrl.u32 %v292, 16
        %v361 = vrot.slane %v359, 4
        %v362 = vor.u32 %v361, %v357
        %v363 = vrot.slane %v362, 4
        %v365 = vshll.u32 %v293, 16
        %v367 = vrot.slane %v365, 5
        %v368 = vsel %vm320, %v363, %v367
        %v370 = vshrl.u32 %v294, 16
        %v372 = vrot.slane %v370, 4
        %v373 = vshll.u32 %v294, 16
        %v375 = vrot.slane %v373, 5
        %v376 = vor.u32 %v372, %v375
        %v377 = vrot.slane %v376, 4
        %v379 = vshll.u32 %v295, 16
        %v381 = vrot.slane %v379, 5
        %v382 = vsel %vm320, %v377, %v381
        %v383 = vshrl.u32 %v295, 16
        %v385 = vrot.slane %v383, 4
        %v386 = vor.u32 %v385, %v381
        %v387 = vrot.slane %v386, 4
        %v389 = vshll.u32 %v296, 16
        %v391 = vrot.slane %v389, 5
        %v392 = vsel %vm320, %v387, %v391
        %v394 = vshrl.u32 %v297, 16
        %v396 = vrot.slane %v394, 4
        %v397 = vshll.u32 %v297, 16
        %v399 = vrot.slane %v397, 5
        %v400 = vor.u32 %v396, %v399
        %v401 = vrot.slane %v400, 4
        %v403 = vshll.u32 %v298, 16
        %v405 = vrot.slane %v403, 5
        %v406 = vsel %vm320, %v401, %v405
        %v407 = vshrl.u32 %v298, 16
        %v409 = vrot.slane %v407, 4
        %v410 = vor.u32 %v409, %v405
        %v411 = vrot.slane %v410, 4
        %v413 = vshll.u32 %v299, 16
        %v415 = vrot.slane %v413, 5
        %v416 = vsel %vm320, %v411, %v415
        %v418 = vshrl.u32 %v300, 16
        %v420 = vrot.slane %v418, 4
        %v421 = vshll.u32 %v300, 16
        %v423 = vrot.slane %v421, 5
        %v424 = vor.u32 %v420, %v423
        %v425 = vrot.slane %v424, 4
        %v427 = vshll.u32 %v301, 16
        %v429 = vrot.slane %v427, 5
        %v430 = vsel %vm320, %v425, %v429
        %v431 = vshrl.u32 %v301, 16
        %v433 = vrot.slane %v431, 4
        %v434 = vor.u32 %v433, %v429
        %v435 = vrot.slane %v434, 4
        %v437 = vshll.u32 %v302, 16
        %v439 = vrot.slane %v437, 5
        %v440 = vsel %vm320, %v435, %v439
        %v442 = vshrl.u32 %v303, 16
        %v444 = vrot.slane %v442, 4
        %v445 = vshll.u32 %v303, 16
        %v447 = vrot.slane %v445, 5
        %v448 = vor.u32 %v444, %v447
        %v449 = vrot.slane %v448, 4
        %v451 = vshll.u32 %v304, 16
        %v453 = vrot.slane %v451, 5
        %v454 = vsel %vm320, %v449, %v453
        %v455 = vshrl.u32 %v304, 16
        %v457 = vrot.slane %v455, 4
        %v458 = vor.u32 %v457, %v453
        %v459 = vrot.slane %v458, 4
        %v461 = vshll.u32 %v305, 16
        %v463 = vrot.slane %v461, 5
        %v464 = vsel %vm320, %v459, %v463
        %v466 = vshrl.u32 %v306, 16
        %v468 = vrot.slane %v466, 4
        %v469 = vshll.u32 %v306, 16
        %v471 = vrot.slane %v469, 5
        %v472 = vor.u32 %v468, %v471
        %v473 = vrot.slane %v472, 4
        %v475 = vshll.u32 %v307, 16
        %v477 = vrot.slane %v475, 5
        %v478 = vsel %vm320, %v473, %v477
        %v479 = vshrl.u32 %v307, 16
        %v481 = vrot.slane %v479, 4
        %v482 = vor.u32 %v481, %v477
        %v483 = vrot.slane %v482, 4
        %v485 = vshll.u32 %v308, 16
        %v487 = vrot.slane %v485, 5
        %v488 = vsel %vm320, %v483, %v487
        %v490 = vshrl.u32 %v309, 16
        %v492 = vrot.slane %v490, 4
        %v493 = vshll.u32 %v309, 16
        %v495 = vrot.slane %v493, 5
        %v496 = vor.u32 %v492, %v495
        %v497 = vrot.slane %v496, 4
        %v499 = vshll.u32 %v310, 16
        %v501 = vrot.slane %v499, 5
        %v502 = vsel %vm320, %v497, %v501
        %v503 = vshrl.u32 %v310, 16
        %v505 = vrot.slane %v503, 4
        %v506 = vor.u32 %v505, %v501
        %v507 = vrot.slane %v506, 4
        %v509 = vshll.u32 %v311, 16
        %v511 = vrot.slane %v509, 5
        %v512 = vsel %vm320, %v507, %v511
        %v514 = vshrl.u32 %v312, 16
        %v516 = vrot.slane %v514, 4
        %v517 = vshll.u32 %v312, 16
        %v519 = vrot.slane %v517, 5
        %v520 = vor.u32 %v516, %v519
        %v521 = vrot.slane %v520, 4
        %v523 = vshll.u32 %v313, 16
        %v525 = vrot.slane %v523, 5
        %v526 = vsel %vm320, %v521, %v525
        %v527 = vshrl.u32 %v313, 16
        %v529 = vrot.slane %v527, 4
        %v530 = vor.u32 %v529, %v525
        %v531 = vrot.slane %v530, 4
        %v533 = vshll.u32 %v314, 16
        %v535 = vrot.slane %v533, 5
        %v536 = vsel %vm320, %v531, %v535
        %v538 = vshrl.u32 %v315, 16
        %v540 = vrot.slane %v538, 4
        %v541 = vshll.u32 %v315, 16
        %v543 = vrot.slane %v541, 5
        %v544 = vor.u32 %v540, %v543
        %v545 = vrot.slane %v544, 4
        %v547 = vshll.u32 %v316, 16
        %v549 = vrot.slane %v547, 5
        %v550 = vsel %vm320, %v545, %v549
        %v551 = vshrl.u32 %v316, 16
        %v553 = vrot.slane %v551, 4
        %v554 = vor.u32 %v553, %v549
        %v555 = vrot.slane %v554, 4
        %v557 = vshll.u32 %v317, 16
        %v559 = vrot.slane %v557, 5
        %v560 = vsel %vm320, %v555, %v559
        %v561 = vunpack.c.l.b16 %v334
        %v562 = vunpack.c.l.b16 %v344
        %v563 = vunpack.c.l.b16 %v358
        %v564 = vunpack.c.l.b16 %v368
        %v565 = vunpack.c.l.b16 %v382
        %v566 = vunpack.c.l.b16 %v392
        %v567 = vunpack.c.l.b16 %v406
        %v568 = vunpack.c.l.b16 %v416
        %v569 = vunpack.c.l.b16 %v430
        %v570 = vunpack.c.l.b16 %v440
        %v571 = vunpack.c.l.b16 %v454
        %v572 = vunpack.c.l.b16 %v464
        %v573 = vunpack.c.l.b16 %v478
        %v574 = vunpack.c.l.b16 %v488
        %v575 = vunpack.c.l.b16 %v502
        %v576 = vunpack.c.l.b16 %v512
        %v577 = vunpack.c.l.b16 %v526
        %v578 = vunpack.c.l.b16 %v536
        %v579 = vunpack.c.l.b16 %v550
        %v580 = vunpack.c.l.b16 %v560
        %v581 = vpack.c.b16 %v562, %v561
        %v582 = vpack.c.b16 %v564, %v563
        %v583 = vpack.c.b16 %v566, %v565
        %v584 = vpack.c.b16 %v568, %v567
        %v585 = vpack.c.b16 %v570, %v569
        %v586 = vpack.c.b16 %v572, %v571
        %v587 = vpack.c.b16 %v574, %v573
        %v588 = vpack.c.b16 %v576, %v575
        %v589 = vpack.c.b16 %v578, %v577
        %v590 = vpack.c.b16 %v580, %v579
        %591 = vrot.lane.b32.xlu0 %v581, 4
        %v592 = vpop.permute.xlu0 %591
        %593 = vrot.lane.b32.xlu0 %v582, 4
        %v594 = vpop.permute.xlu0 %593
        %595 = vrot.lane.b32.xlu0 %v583, 4
        %v596 = vpop.permute.xlu0 %595
        %597 = vrot.lane.b32.xlu0 %v584, 4
        %v598 = vpop.permute.xlu0 %597
        %599 = vrot.lane.b32.xlu0 %v585, 4
        %v600 = vpop.permute.xlu0 %599
        %601 = vrot.lane.b32.xlu0 %v586, 4
        %v602 = vpop.permute.xlu0 %601
        %603 = vrot.lane.b32.xlu0 %v587, 4
        %v604 = vpop.permute.xlu0 %603
        %605 = vrot.lane.b32.xlu0 %v588, 4
        %v606 = vpop.permute.xlu0 %605
        %607 = vrot.lane.b32.xlu0 %v589, 4
        %v608 = vpop.permute.xlu0 %607
        %609 = vrot.lane.b32.xlu0 %v590, 4
        %v610 = vpop.permute.xlu0 %609
        %vm621 = vcmask 64544
        %622 = vst.msk [vmem:[#allocation2] sm:$0xff] %vm621, %v592
        %623 = vst.msk [vmem:[#allocation2 + $0x8] sm:$0xff] %vm621, %v594
        %624 = vst.msk [vmem:[#allocation2 + $0x10] sm:$0xff] %vm621, %v596
        %625 = vst.msk [vmem:[#allocation2 + $0x18] sm:$0xff] %vm621, %v598
        %626 = vst.msk [vmem:[#allocation2 + $0x20] sm:$0xff] %vm621, %v600
        %627 = vst.msk [vmem:[#allocation2 + $0x28] sm:$0xff] %vm621, %v602
        %628 = vst.msk [vmem:[#allocation2 + $0x30] sm:$0xff] %vm621, %v604
        %629 = vst.msk [vmem:[#allocation2 + $0x38] sm:$0xff] %vm621, %v606
        %630 = vst.msk [vmem:[#allocation2 + $0x40] sm:$0xff] %vm621, %v608
        %631 = vst.msk [vmem:[#allocation2 + $0x48] sm:$0xff] %vm621, %v610
        %v632 = vld [vmem:[%s196] sm:$0xe]
        %v633 = vld [vmem:[%s196 + $0x4] sm:$0xf]
        %v634 = vld [vmem:[%s196 + $0x8] sm:$0x1]
        %v635 = vld [vmem:[%s196 + $0xc] sm:$0xe]
        %v636 = vld [vmem:[%s196 + $0x10] sm:$0xf]
        %v637 = vld [vmem:[%s196 + $0x14] sm:$0x1]
        %v638 = vld [vmem:[%s196 + $0x18] sm:$0xe]
        %v639 = vld [vmem:[%s196 + $0x1c] sm:$0xf]
        %v640 = vld [vmem:[%s196 + $0x20] sm:$0x1]
        %v641 = vld [vmem:[%s196 + $0x24] sm:$0xe]
        %v642 = vld [vmem:[%s196 + $0x28] sm:$0xf]
        %v643 = vld [vmem:[%s196 + $0x2c] sm:$0x1]
        %v644 = vld [vmem:[%s196 + $0x30] sm:$0xe]
        %v645 = vld [vmem:[%s196 + $0x34] sm:$0xf]
        %v646 = vld [vmem:[%s196 + $0x38] sm:$0x1]
        %v647 = vld [vmem:[%s196 + $0x3c] sm:$0xe]
        %v648 = vld [vmem:[%s196 + $0x40] sm:$0xf]
        %v649 = vld [vmem:[%s196 + $0x44] sm:$0x1]
        %v650 = vld [vmem:[%s196 + $0x48] sm:$0xe]
        %v651 = vld [vmem:[%s196 + $0x4c] sm:$0xf]
        %v652 = vld [vmem:[%s196 + $0x50] sm:$0x1]
        %v653 = vld [vmem:[%s196 + $0x54] sm:$0xe]
        %v654 = vld [vmem:[%s196 + $0x58] sm:$0xf]
        %v655 = vld [vmem:[%s196 + $0x5c] sm:$0x1]
        %v656 = vld [vmem:[%s196 + $0x60] sm:$0xe]
        %v657 = vld [vmem:[%s196 + $0x64] sm:$0xf]
        %v658 = vld [vmem:[%s196 + $0x68] sm:$0x1]
        %v659 = vld [vmem:[%s196 + $0x6c] sm:$0xe]
        %v660 = vld [vmem:[%s196 + $0x70] sm:$0xf]
        %v661 = vld [vmem:[%s196 + $0x74] sm:$0x1]
        %vm692 = vcmask 1042432
        %vm693 = vcmask 1046532
        %vm694 = vmor %vm692, %vm693
        %v695 = vrot.slane %v632, 5
        %v696 = vrot.slane %v695, 4
        %v697 = vrot.slane %v633, 5
        %v698 = vsel %vm694, %v696, %v697
        %v699 = vrot.slane %v697, 4
        %v700 = vrot.slane %v634, 5
        %v701 = vsel %vm694, %v699, %v700
        %v702 = vrot.slane %v635, 5
        %v703 = vrot.slane %v702, 4
        %v704 = vrot.slane %v636, 5
        %v705 = vsel %vm694, %v703, %v704
        %v706 = vrot.slane %v704, 4
        %v707 = vrot.slane %v637, 5
        %v708 = vsel %vm694, %v706, %v707
        %v709 = vrot.slane %v638, 5
        %v710 = vrot.slane %v709, 4
        %v711 = vrot.slane %v639, 5
        %v712 = vsel %vm694, %v710, %v711
        %v713 = vrot.slane %v711, 4
        %v714 = vrot.slane %v640, 5
        %v715 = vsel %vm694, %v713, %v714
        %v716 = vrot.slane %v641, 5
        %v717 = vrot.slane %v716, 4
        %v718 = vrot.slane %v642, 5
        %v719 = vsel %vm694, %v717, %v718
        %v720 = vrot.slane %v718, 4
        %v721 = vrot.slane %v643, 5
        %v722 = vsel %vm694, %v720, %v721
        %v723 = vrot.slane %v644, 5
        %v724 = vrot.slane %v723, 4
        %v725 = vrot.slane %v645, 5
        %v726 = vsel %vm694, %v724, %v725
        %v727 = vrot.slane %v725, 4
        %v728 = vrot.slane %v646, 5
        %v729 = vsel %vm694, %v727, %v728
        %v730 = vrot.slane %v647, 5
        %v731 = vrot.slane %v730, 4
        %v732 = vrot.slane %v648, 5
        %v733 = vsel %vm694, %v731, %v732
        %v734 = vrot.slane %v732, 4
        %v735 = vrot.slane %v649, 5
        %v736 = vsel %vm694, %v734, %v735
        %v737 = vrot.slane %v650, 5
        %v738 = vrot.slane %v737, 4
        %v739 = vrot.slane %v651, 5
        %v740 = vsel %vm694, %v738, %v739
        %v741 = vrot.slane %v739, 4
        %v742 = vrot.slane %v652, 5
        %v743 = vsel %vm694, %v741, %v742
        %v744 = vrot.slane %v653, 5
        %v745 = vrot.slane %v744, 4
        %v746 = vrot.slane %v654, 5
        %v747 = vsel %vm694, %v745, %v746
        %v748 = vrot.slane %v746, 4
        %v749 = vrot.slane %v655, 5
        %v750 = vsel %vm694, %v748, %v749
        %v751 = vrot.slane %v656, 5
        %v752 = vrot.slane %v751, 4
        %v753 = vrot.slane %v657, 5
        %v754 = vsel %vm694, %v752, %v753
        %v755 = vrot.slane %v753, 4
        %v756 = vrot.slane %v658, 5
        %v757 = vsel %vm694, %v755, %v756
        %v758 = vrot.slane %v659, 5
        %v759 = vrot.slane %v758, 4
        %v760 = vrot.slane %v660, 5
        %v761 = vsel %vm694, %v759, %v760
        %v762 = vrot.slane %v760, 4
        %v763 = vrot.slane %v661, 5
        %v764 = vsel %vm694, %v762, %v763
        %v765 = vunpack.c.l.b16 %v698
        %v766 = vunpack.c.l.b16 %v701
        %v767 = vunpack.c.l.b16 %v705
        %v768 = vunpack.c.l.b16 %v708
        %v769 = vunpack.c.l.b16 %v712
        %v770 = vunpack.c.l.b16 %v715
        %v771 = vunpack.c.l.b16 %v719
        %v772 = vunpack.c.l.b16 %v722
        %v773 = vunpack.c.l.b16 %v726
        %v774 = vunpack.c.l.b16 %v729
        %v775 = vunpack.c.l.b16 %v733
        %v776 = vunpack.c.l.b16 %v736
        %v777 = vunpack.c.l.b16 %v740
        %v778 = vunpack.c.l.b16 %v743
        %v779 = vunpack.c.l.b16 %v747
        %v780 = vunpack.c.l.b16 %v750
        %v781 = vunpack.c.l.b16 %v754
        %v782 = vunpack.c.l.b16 %v757
        %v783 = vunpack.c.l.b16 %v761
        %v784 = vunpack.c.l.b16 %v764
        %v785 = vpack.c.b16 %v766, %v765
        %v786 = vpack.c.b16 %v768, %v767
        %v787 = vpack.c.b16 %v770, %v769
        %v788 = vpack.c.b16 %v772, %v771
        %v789 = vpack.c.b16 %v774, %v773
        %v790 = vpack.c.b16 %v776, %v775
        %v791 = vpack.c.b16 %v778, %v777
        %v792 = vpack.c.b16 %v780, %v779
        %v793 = vpack.c.b16 %v782, %v781
        %v794 = vpack.c.b16 %v784, %v783
        %795 = vrot.lane.b32.xlu0 %v785, 8
        %v796 = vpop.permute.xlu0 %795
        %797 = vrot.lane.b32.xlu0 %v786, 8
        %v798 = vpop.permute.xlu0 %797
        %799 = vrot.lane.b32.xlu0 %v787, 8
        %v800 = vpop.permute.xlu0 %799
        %801 = vrot.lane.b32.xlu0 %v788, 8
        %v802 = vpop.permute.xlu0 %801
        %803 = vrot.lane.b32.xlu0 %v789, 8
        %v804 = vpop.permute.xlu0 %803
        %805 = vrot.lane.b32.xlu0 %v790, 8
        %v806 = vpop.permute.xlu0 %805
        %807 = vrot.lane.b32.xlu0 %v791, 8
        %v808 = vpop.permute.xlu0 %807
        %809 = vrot.lane.b32.xlu0 %v792, 8
        %v810 = vpop.permute.xlu0 %809
        %811 = vrot.lane.b32.xlu0 %v793, 8
        %v812 = vpop.permute.xlu0 %811
        %813 = vrot.lane.b32.xlu0 %v794, 8
        %v814 = vpop.permute.xlu0 %813
        %vm825 = vcmask 97344
        %826 = vst.msk [vmem:[#allocation2] sm:$0xff] %vm825, %v796
        %827 = vst.msk [vmem:[#allocation2 + $0x8] sm:$0xff] %vm825, %v798
        %828 = vst.msk [vmem:[#allocation2 + $0x10] sm:$0xff] %vm825, %v800
        %829 = vst.msk [vmem:[#allocation2 + $0x18] sm:$0xff] %vm825, %v802
        %830 = vst.msk [vmem:[#allocation2 + $0x20] sm:$0xff] %vm825, %v804
        %831 = vst.msk [vmem:[#allocation2 + $0x28] sm:$0xff] %vm825, %v806
        %832 = vst.msk [vmem:[#allocation2 + $0x30] sm:$0xff] %vm825, %v808
        %833 = vst.msk [vmem:[#allocation2 + $0x38] sm:$0xff] %vm825, %v810
        %834 = vst.msk [vmem:[#allocation2 + $0x40] sm:$0xff] %vm825, %v812
        %835 = vst.msk [vmem:[#allocation2 + $0x48] sm:$0xff] %vm825, %v814
        %v836 = vld [vmem:[#allocation2] sm:$0xff]
        %v837 = vld [vmem:[#allocation2 + $0x8] sm:$0xff]
        %v838 = vld [vmem:[#allocation2 + $0x10] sm:$0xff]
        %v839 = vld [vmem:[#allocation2 + $0x18] sm:$0xff]
        %v840 = vld [vmem:[#allocation2 + $0x20] sm:$0xff]
        %v841 = vld [vmem:[#allocation2 + $0x28] sm:$0xff]
        %v842 = vld [vmem:[#allocation2 + $0x30] sm:$0xff]
        %v843 = vld [vmem:[#allocation2 + $0x38] sm:$0xff]
        %v844 = vld [vmem:[#allocation6] sm:$0xf]
        %v845 = vld [vmem:[#allocation2 + $0x40] sm:$0xff]
        %s846 = scalar_lea.vmem [#allocation6], 8
        %v847 = vld [vmem:[%s846] sm:$0xf]
        %vm848 = vcmask 64512
        %v850 = vsel %vm848, %v837, 0
        %v853 = vsel %vm848, %v838, 0
        %v856 = vsel %vm848, %v839, 0
        %v859 = vsel %vm848, %v840, 0
        %v862 = vsel %vm848, %v841, 0
        %v865 = vsel %vm848, %v842, 0
        %v868 = vsel %vm848, %v843, 0
        %v871 = vsel %vm848, %v845, 0
        %vm873 = vcmask 1043456
        %v875 = vsel %vm873, %v847, 0
        %877 = vmatprep.subr.bf16.mxu0 0
        %878 = vmatpush1.bf16.msra.mxu0 %v875
        %879 = vmatprep.subr.bf16.mxu0 0
        %880 = vmatpush1.bf16.msra.mxu0 0
        %881 = vmatprep.subr.bf16.mxu0 0
        %882 = vmatpush1.bf16.msra.mxu0 0
        %883 = vmatprep.subr.bf16.mxu0 0
        %884 = vmatpush1.bf16.msra.mxu0 0
        %885 = vmatprep.subr.bf16.mxu0 0
        %886 = vmatpush1.bf16.msra.mxu0 0
        %887 = vmatprep.subr.bf16.mxu0 0
        %888 = vmatpush1.bf16.msra.mxu0 0
        %889 = vmatprep.subr.bf16.mxu0 0
        %890 = vmatpush1.bf16.msra.mxu0 0
        %891 = vmatprep.subr.bf16.mxu0 0
        %892 = vmatpush1.bf16.msra.mxu0 0
        %893 = vmatprep.subr.bf16.mxu0 0
        %894 = vmatpush1.bf16.msra.mxu0 0
        %895 = vmatprep.subr.bf16.mxu0 0
        %896 = vmatpush1.bf16.msra.mxu0 0
        %897 = vmatprep.subr.bf16.mxu0 0
        %898 = vmatpush1.bf16.msra.mxu0 0
        %899 = vmatprep.subr.bf16.mxu0 0
        %900 = vmatpush1.bf16.msra.mxu0 0
        %901 = vmatprep.subr.bf16.mxu0 0
        %902 = vmatpush1.bf16.msra.mxu0 0
        %903 = vmatprep.subr.bf16.mxu0 0
        %904 = vmatpush1.bf16.msra.mxu0 0
        %905 = vmatprep.subr.bf16.mxu0 0
        %906 = vmatpush1.bf16.msra.mxu0 0
        %907 = vmatprep.subr.bf16.mxu0 0
        %908 = vmatpush1.bf16.msra.mxu0 0
        %909 = vmatprep.mubr.bf16.mxu0 0
        %910 = vmatmul.mubr.bf16.gmra.mrb[0].mxu0 %v850
        %v911 = vpop.f32.mrb[0].mxu0
        %v912 = vadd.f32 0.0, %v911
        %v913 = vpop.f32.mrb[0].mxu0
        %v914 = vpop.f32.mrb[0].mxu0
        %v915 = vadd.f32 0.0, %v914
        %v916 = vpop.f32.mrb[0].mxu0
        %917 = vmatprep.mubr.bf16.mxu0 0
        %918 = vmatmul.mubr.bf16.gmra.mrb[0].mxu0 %v853
        %v919 = vpop.f32.mrb[0].mxu0
        %v920 = vadd.f32 0.0, %v919
        %v921 = vpop.f32.mrb[0].mxu0
        %v922 = vpop.f32.mrb[0].mxu0
        %v923 = vadd.f32 0.0, %v922
        %v924 = vpop.f32.mrb[0].mxu0
        %925 = vmatprep.mubr.bf16.mxu0 0
        %926 = vmatmul.mubr.bf16.gmra.mrb[0].mxu0 %v856
        %v927 = vpop.f32.mrb[0].mxu0
        %v928 = vadd.f32 0.0, %v927
        %v929 = vpop.f32.mrb[0].mxu0
        %v930 = vpop.f32.mrb[0].mxu0
        %v931 = vadd.f32 0.0, %v930
        %v932 = vpop.f32.mrb[0].mxu0
        %933 = vmatprep.mubr.bf16.mxu0 0
        %934 = vmatmul.mubr.bf16.gmra.mrb[0].mxu0 %v859
        %v935 = vpop.f32.mrb[0].mxu0
        %v936 = vadd.f32 0.0, %v935
        %v937 = vpop.f32.mrb[0].mxu0
        %v938 = vpop.f32.mrb[0].mxu0
        %v939 = vadd.f32 0.0, %v938
        %v940 = vpop.f32.mrb[0].mxu0
        %941 = vmatprep.mubr.bf16.mxu0 0
        %942 = vmatmul.mubr.bf16.gmra.mrb[0].mxu0 %v862
        %v943 = vpop.f32.mrb[0].mxu0
        %v944 = vadd.f32 0.0, %v943
        %v945 = vpop.f32.mrb[0].mxu0
        %v946 = vpop.f32.mrb[0].mxu0
        %v947 = vadd.f32 0.0, %v946
        %v948 = vpop.f32.mrb[0].mxu0
        %949 = vmatprep.mubr.bf16.mxu0 0
        %950 = vmatmul.mubr.bf16.gmra.mrb[0].mxu0 %v865
        %v951 = vpop.f32.mrb[0].mxu0
        %v952 = vadd.f32 0.0, %v951
        %v953 = vpop.f32.mrb[0].mxu0
        %v954 = vpop.f32.mrb[0].mxu0
        %v955 = vadd.f32 0.0, %v954
        %v956 = vpop.f32.mrb[0].mxu0
        %957 = vmatprep.mubr.bf16.mxu0 0
        %958 = vmatmul.mubr.bf16.gmra.mrb[0].mxu0 %v868
        %v959 = vpop.f32.mrb[0].mxu0
        %v960 = vadd.f32 0.0, %v959
        %v961 = vpop.f32.mrb[0].mxu0
        %v962 = vpop.f32.mrb[0].mxu0
        %v963 = vadd.f32 0.0, %v962
        %v964 = vpop.f32.mrb[0].mxu0
        %965 = vmatprep.mubr.bf16.mxu0 0
        %966 = vmatmul.mubr.bf16.gmra.mrb[0].mxu0 %v871
        %v967 = vpop.f32.mrb[0].mxu0
        %v968 = vadd.f32 0.0, %v967
        %v969 = vpop.f32.mrb[0].mxu0
        %v970 = vpop.f32.mrb[0].mxu0
        %v971 = vadd.f32 0.0, %v970
        %v972 = vpop.f32.mrb[0].mxu0
        %973 = vdwg.mxu0
        %v975 = vsel %vm848, %v836, 0
        %v978 = vsel %vm873, %v844, 0
        %980 = vmatprep.subr.bf16.mxu0 0
        %981 = vmatpush1.bf16.msra.mxu0 %v978
        %982 = vmatprep.subr.bf16.mxu0 0
        %983 = vmatpush1.bf16.msra.mxu0 0
        %984 = vmatprep.subr.bf16.mxu0 0
        %985 = vmatpush1.bf16.msra.mxu0 0
        %986 = vmatprep.subr.bf16.mxu0 0
        %987 = vmatpush1.bf16.msra.mxu0 0
        %988 = vmatprep.subr.bf16.mxu0 0
        %989 = vmatpush1.bf16.msra.mxu0 0
        %990 = vmatprep.subr.bf16.mxu0 0
        %991 = vmatpush1.bf16.msra.mxu0 0
        %992 = vmatprep.subr.bf16.mxu0 0
        %993 = vmatpush1.bf16.msra.mxu0 0
        %994 = vmatprep.subr.bf16.mxu0 0
        %995 = vmatpush1.bf16.msra.mxu0 0
        %996 = vmatprep.subr.bf16.mxu0 0
        %997 = vmatpush1.bf16.msra.mxu0 0
        %998 = vmatprep.subr.bf16.mxu0 0
        %999 = vmatpush1.bf16.msra.mxu0 0
        %1000 = vmatprep.subr.bf16.mxu0 0
        %1001 = vmatpush1.bf16.msra.mxu0 0
        %1002 = vmatprep.subr.bf16.mxu0 0
        %1003 = vmatpush1.bf16.msra.mxu0 0
        %1004 = vmatprep.subr.bf16.mxu0 0
        %1005 = vmatpush1.bf16.msra.mxu0 0
        %1006 = vmatprep.subr.bf16.mxu0 0
        %1007 = vmatpush1.bf16.msra.mxu0 0
        %1008 = vmatprep.subr.bf16.mxu0 0
        %1009 = vmatpush1.bf16.msra.mxu0 0
        %1010 = vmatprep.subr.bf16.mxu0 0
        %1011 = vmatpush1.bf16.msra.mxu0 0
        %1012 = vmatprep.mubr.bf16.mxu0 0
        %1013 = vmatmul.mubr.bf16.gmra.mrb[0].mxu0 %v975
        %v1014 = vpop.f32.mrb[0].mxu0
        %v1015 = vadd.f32 %v912, %v1014
        %v1016 = vpop.f32.mrb[0].mxu0
        %v1017 = vpop.f32.mrb[0].mxu0
        %v1018 = vadd.f32 %v915, %v1017
        %v1019 = vpop.f32.mrb[0].mxu0
        %1020 = vmatprep.mubr.bf16.mxu0 0
        %1021 = vmatmul.mubr.bf16.gmra.mrb[0].mxu0 %v850
        %v1022 = vpop.f32.mrb[0].mxu0
        %v1023 = vadd.f32 %v920, %v1022
        %v1024 = vpop.f32.mrb[0].mxu0
        %v1025 = vpop.f32.mrb[0].mxu0
        %v1026 = vadd.f32 %v923, %v1025
        %v1027 = vpop.f32.mrb[0].mxu0
        %1028 = vmatprep.mubr.bf16.mxu0 0
        %1029 = vmatmul.mubr.bf16.gmra.mrb[0].mxu0 %v853
        %v1030 = vpop.f32.mrb[0].mxu0
        %v1031 = vadd.f32 %v928, %v1030
        %v1032 = vpop.f32.mrb[0].mxu0
        %v1033 = vpop.f32.mrb[0].mxu0
        %v1034 = vadd.f32 %v931, %v1033
        %v1035 = vpop.f32.mrb[0].mxu0
        %1036 = vmatprep.mubr.bf16.mxu0 0
        %1037 = vmatmul.mubr.bf16.gmra.mrb[0].mxu0 %v856
        %v1038 = vpop.f32.mrb[0].mxu0
        %v1039 = vadd.f32 %v936, %v1038
        %v1040 = vpop.f32.mrb[0].mxu0
        %v1041 = vpop.f32.mrb[0].mxu0
        %v1042 = vadd.f32 %v939, %v1041
        %v1043 = vpop.f32.mrb[0].mxu0
        %1044 = vmatprep.mubr.bf16.mxu0 0
        %1045 = vmatmul.mubr.bf16.gmra.mrb[0].mxu0 %v859
        %v1046 = vpop.f32.mrb[0].mxu0
        %v1047 = vadd.f32 %v944, %v1046
        %v1048 = vpop.f32.mrb[0].mxu0
        %v1049 = vpop.f32.mrb[0].mxu0
        %v1050 = vadd.f32 %v947, %v1049
        %v1051 = vpop.f32.mrb[0].mxu0
        %1052 = vmatprep.mubr.bf16.mxu0 0
        %1053 = vmatmul.mubr.bf16.gmra.mrb[0].mxu0 %v862
        %v1054 = vpop.f32.mrb[0].mxu0
        %v1055 = vadd.f32 %v952, %v1054
        %v1056 = vpop.f32.mrb[0].mxu0
        %v1057 = vpop.f32.mrb[0].mxu0
        %v1058 = vadd.f32 %v955, %v1057
        %v1059 = vpop.f32.mrb[0].mxu0
        %1060 = vmatprep.mubr.bf16.mxu0 0
        %1061 = vmatmul.mubr.bf16.gmra.mrb[0].mxu0 %v865
        %v1062 = vpop.f32.mrb[0].mxu0
        %v1063 = vadd.f32 %v960, %v1062
        %v1064 = vpop.f32.mrb[0].mxu0
        %v1065 = vpop.f32.mrb[0].mxu0
        %v1066 = vadd.f32 %v963, %v1065
        %v1067 = vpop.f32.mrb[0].mxu0
        %1068 = vmatprep.mubr.bf16.mxu0 0
        %1069 = vmatmul.mubr.bf16.gmra.mrb[0].mxu0 %v868
        %v1070 = vpop.f32.mrb[0].mxu0
        %v1071 = vadd.f32 %v968, %v1070
        %v1072 = vpop.f32.mrb[0].mxu0
        %v1073 = vpop.f32.mrb[0].mxu0
        %v1074 = vadd.f32 %v971, %v1073
        %v1075 = vpop.f32.mrb[0].mxu0
        %1076 = vdwg.mxu0
        %v1077 = vmax.f32 %v1015, 0.0
        %v1078 = vmax.f32 %v1018, 0.0
        %v1079 = vmax.f32 %v1023, 0.0
        %v1080 = vmax.f32 %v1026, 0.0
        %v1081 = vmax.f32 %v1031, 0.0
        %v1082 = vmax.f32 %v1034, 0.0
        %v1083 = vmax.f32 %v1039, 0.0
        %v1084 = vmax.f32 %v1042, 0.0
        %v1085 = vmax.f32 %v1047, 0.0
        %v1086 = vmax.f32 %v1050, 0.0
        %v1087 = vmax.f32 %v1055, 0.0
        %v1088 = vmax.f32 %v1058, 0.0
        %v1089 = vmax.f32 %v1063, 0.0
        %v1090 = vmax.f32 %v1066, 0.0
        %v1091 = vmax.f32 %v1071, 0.0
        %v1092 = vmax.f32 %v1074, 0.0
        %v1093 = vpack.c.bf16 %v1078, %v1077
        %v1094 = vpack.c.bf16 %v1080, %v1079
        %v1095 = vpack.c.bf16 %v1082, %v1081
        %v1096 = vpack.c.bf16 %v1084, %v1083
        %v1097 = vpack.c.bf16 %v1086, %v1085
        %v1098 = vpack.c.bf16 %v1088, %v1087
        %v1099 = vpack.c.bf16 %v1090, %v1089
        %v1100 = vpack.c.bf16 %v1092, %v1091
        %v1109 = vunpack.c.l.b16 %v1093
        %v1110 = vunpack.c.h.b16 %v1093
        %v1111 = vunpack.c.l.b16 %v1094
        %v1112 = vunpack.c.h.b16 %v1094
        %v1113 = vunpack.c.l.b16 %v1095
        %v1114 = vunpack.c.h.b16 %v1095
        %v1115 = vunpack.c.l.b16 %v1096
        %v1116 = vunpack.c.h.b16 %v1096
        %v1117 = vunpack.c.l.b16 %v1097
        %v1118 = vunpack.c.h.b16 %v1097
        %v1119 = vunpack.c.l.b16 %v1098
        %v1120 = vunpack.c.h.b16 %v1098
        %v1121 = vunpack.c.l.b16 %v1099
        %v1122 = vunpack.c.h.b16 %v1099
        %v1123 = vunpack.c.l.b16 %v1100
        %v1124 = vunpack.c.h.b16 %v1100
        %v1125 = vpack.c.b16 %v1109, %v1109
        %v1126 = vpack.c.b16 %v1110, %v1110
        %v1127 = vpack.c.b16 %v1111, %v1111
        %v1128 = vpack.c.b16 %v1112, %v1112
        %v1129 = vpack.c.b16 %v1113, %v1113
        %v1130 = vpack.c.b16 %v1114, %v1114
        %v1131 = vpack.c.b16 %v1115, %v1115
        %v1132 = vpack.c.b16 %v1116, %v1116
        %v1133 = vpack.c.b16 %v1117, %v1117
        %v1134 = vpack.c.b16 %v1118, %v1118
        %v1135 = vpack.c.b16 %v1119, %v1119
        %v1136 = vpack.c.b16 %v1120, %v1120
        %v1137 = vpack.c.b16 %v1121, %v1121
        %v1138 = vpack.c.b16 %v1122, %v1122
        %v1139 = vpack.c.b16 %v1123, %v1123
        %v1140 = vpack.c.b16 %v1124, %v1124
        %vm1157 = vcmask 60416
        %1158 = vst.msk [vmem:[%s190] sm:$0xf] %vm1157, %v1125
        %1159 = vst.msk [vmem:[%s190 + $0x4] sm:$0xf] %vm1157, %v1126
        %1160 = vst.msk [vmem:[%s190 + $0x10] sm:$0xf] %vm1157, %v1127
        %1161 = vst.msk [vmem:[%s190 + $0x14] sm:$0xf] %vm1157, %v1128
        %1162 = vst.msk [vmem:[%s190 + $0x20] sm:$0xf] %vm1157, %v1129
        %1163 = vst.msk [vmem:[%s190 + $0x24] sm:$0xf] %vm1157, %v1130
        %1164 = vst.msk [vmem:[%s190 + $0x30] sm:$0xf] %vm1157, %v1131
        %1165 = vst.msk [vmem:[%s190 + $0x34] sm:$0xf] %vm1157, %v1132
        %1166 = vst.msk [vmem:[%s190 + $0x40] sm:$0xf] %vm1157, %v1133
        %1167 = vst.msk [vmem:[%s190 + $0x44] sm:$0xf] %vm1157, %v1134
        %1168 = vst.msk [vmem:[%s190 + $0x50] sm:$0xf] %vm1157, %v1135
        %1169 = vst.msk [vmem:[%s190 + $0x54] sm:$0xf] %vm1157, %v1136
        %1170 = vst.msk [vmem:[%s190 + $0x60] sm:$0xf] %vm1157, %v1137
        %1171 = vst.msk [vmem:[%s190 + $0x64] sm:$0xf] %vm1157, %v1138
        %1172 = vst.msk [vmem:[%s190 + $0x70] sm:$0xf] %vm1157, %v1139
        %1173 = vst.msk [vmem:[%s190 + $0x74] sm:$0xf] %vm1157, %v1140
        %v1174 = vld [vmem:[#allocation2] sm:$0xff]
        %v1175 = vld [vmem:[#allocation2 + $0x8] sm:$0xff]
        %v1176 = vld [vmem:[#allocation2 + $0x10] sm:$0xff]
        %v1177 = vld [vmem:[#allocation2 + $0x18] sm:$0xff]
        %v1178 = vld [vmem:[#allocation2 + $0x20] sm:$0xff]
        %v1179 = vld [vmem:[#allocation2 + $0x28] sm:$0xff]
        %v1180 = vld [vmem:[#allocation2 + $0x30] sm:$0xff]
        %v1181 = vld [vmem:[#allocation2 + $0x38] sm:$0xff]
        %s1182 = scalar_lea.vmem [#allocation6], 4
        %v1183 = vld [vmem:[%s1182] sm:$0xf]
        %v1184 = vld [vmem:[#allocation2 + $0x40] sm:$0xff]
        %s1185 = scalar_lea.vmem [#allocation6], 12
        %v1186 = vld [vmem:[%s1185] sm:$0xf]
        %1195 = vrot.lane.b32.xlu0 %v1175, 124
        %v1196 = vpop.permute.xlu0 %1195
        %1197 = vrot.lane.b32.xlu0 %v1176, 124
        %v1198 = vpop.permute.xlu0 %1197
        %1199 = vrot.lane.b32.xlu0 %v1177, 124
        %v1200 = vpop.permute.xlu0 %1199
        %1201 = vrot.lane.b32.xlu0 %v1178, 124
        %v1202 = vpop.permute.xlu0 %1201
        %1203 = vrot.lane.b32.xlu0 %v1179, 124
        %v1204 = vpop.permute.xlu0 %1203
        %1205 = vrot.lane.b32.xlu0 %v1180, 124
        %v1206 = vpop.permute.xlu0 %1205
        %1207 = vrot.lane.b32.xlu0 %v1181, 124
        %v1208 = vpop.permute.xlu0 %1207
        %1209 = vrot.lane.b32.xlu0 %v1184, 124
        %v1210 = vpop.permute.xlu0 %1209
        %v1212 = vsel %vm848, %v1196, 0
        %v1215 = vsel %vm848, %v1198, 0
        %v1218 = vsel %vm848, %v1200, 0
        %v1221 = vsel %vm848, %v1202, 0
        %v1224 = vsel %vm848, %v1204, 0
        %v1227 = vsel %vm848, %v1206, 0
        %v1230 = vsel %vm848, %v1208, 0
        %v1233 = vsel %vm848, %v1210, 0
        %v1236 = vsel %vm873, %v1186, 0
        %1238 = vmatprep.subr.bf16.mxu0 0
        %1239 = vmatpush1.bf16.msra.mxu0 %v1236
        %1240 = vmatprep.subr.bf16.mxu0 0
        %1241 = vmatpush1.bf16.msra.mxu0 0
        %1242 = vmatprep.subr.bf16.mxu0 0
        %1243 = vmatpush1.bf16.msra.mxu0 0
        %1244 = vmatprep.subr.bf16.mxu0 0
        %1245 = vmatpush1.bf16.msra.mxu0 0
        %1246 = vmatprep.subr.bf16.mxu0 0
        %1247 = vmatpush1.bf16.msra.mxu0 0
        %1248 = vmatprep.subr.bf16.mxu0 0
        %1249 = vmatpush1.bf16.msra.mxu0 0
        %1250 = vmatprep.subr.bf16.mxu0 0
        %1251 = vmatpush1.bf16.msra.mxu0 0
        %1252 = vmatprep.subr.bf16.mxu0 0
        %1253 = vmatpush1.bf16.msra.mxu0 0
        %1254 = vmatprep.subr.bf16.mxu0 0
        %1255 = vmatpush1.bf16.msra.mxu0 0
        %1256 = vmatprep.subr.bf16.mxu0 0
        %1257 = vmatpush1.bf16.msra.mxu0 0
        %1258 = vmatprep.subr.bf16.mxu0 0
        %1259 = vmatpush1.bf16.msra.mxu0 0
        %1260 = vmatprep.subr.bf16.mxu0 0
        %1261 = vmatpush1.bf16.msra.mxu0 0
        %1262 = vmatprep.subr.bf16.mxu0 0
        %1263 = vmatpush1.bf16.msra.mxu0 0
        %1264 = vmatprep.subr.bf16.mxu0 0
        %1265 = vmatpush1.bf16.msra.mxu0 0
        %1266 = vmatprep.subr.bf16.mxu0 0
        %1267 = vmatpush1.bf16.msra.mxu0 0
        %1268 = vmatprep.subr.bf16.mxu0 0
        %1269 = vmatpush1.bf16.msra.mxu0 0
        %1270 = vmatprep.mubr.bf16.mxu0 0
        %1271 = vmatmul.mubr.bf16.gmra.mrb[0].mxu0 %v1212
        %v1272 = vpop.f32.mrb[0].mxu0
        %v1273 = vadd.f32 0.0, %v1272
        %v1274 = vpop.f32.mrb[0].mxu0
        %v1275 = vpop.f32.mrb[0].mxu0
        %v1276 = vadd.f32 0.0, %v1275
        %v1277 = vpop.f32.mrb[0].mxu0
        %1278 = vmatprep.mubr.bf16.mxu0 0
        %1279 = vmatmul.mubr.bf16.gmra.mrb[0].mxu0 %v1215
        %v1280 = vpop.f32.mrb[0].mxu0
        %v1281 = vadd.f32 0.0, %v1280
        %v1282 = vpop.f32.mrb[0].mxu0
        %v1283 = vpop.f32.mrb[0].mxu0
        %v1284 = vadd.f32 0.0, %v1283
        %v1285 = vpop.f32.mrb[0].mxu0
        %1286 = vmatprep.mubr.bf16.mxu0 0
        %1287 = vmatmul.mubr.bf16.gmra.mrb[0].mxu0 %v1218
        %v1288 = vpop.f32.mrb[0].mxu0
        %v1289 = vadd.f32 0.0, %v1288
        %v1290 = vpop.f32.mrb[0].mxu0
        %v1291 = vpop.f32.mrb[0].mxu0
        %v1292 = vadd.f32 0.0, %v1291
        %v1293 = vpop.f32.mrb[0].mxu0
        %1294 = vmatprep.mubr.bf16.mxu0 0
        %1295 = vmatmul.mubr.bf16.gmra.mrb[0].mxu0 %v1221
        %v1296 = vpop.f32.mrb[0].mxu0
        %v1297 = vadd.f32 0.0, %v1296
        %v1298 = vpop.f32.mrb[0].mxu0
        %v1299 = vpop.f32.mrb[0].mxu0
        %v1300 = vadd.f32 0.0, %v1299
        %v1301 = vpop.f32.mrb[0].mxu0
        %1302 = vmatprep.mubr.bf16.mxu0 0
        %1303 = vmatmul.mubr.bf16.gmra.mrb[0].mxu0 %v1224
        %v1304 = vpop.f32.mrb[0].mxu0
        %v1305 = vadd.f32 0.0, %v1304
        %v1306 = vpop.f32.mrb[0].mxu0
        %v1307 = vpop.f32.mrb[0].mxu0
        %v1308 = vadd.f32 0.0, %v1307
        %v1309 = vpop.f32.mrb[0].mxu0
        %1310 = vmatprep.mubr.bf16.mxu0 0
        %1311 = vmatmul.mubr.bf16.gmra.mrb[0].mxu0 %v1227
        %v1312 = vpop.f32.mrb[0].mxu0
        %v1313 = vadd.f32 0.0, %v1312
        %v1314 = vpop.f32.mrb[0].mxu0
        %v1315 = vpop.f32.mrb[0].mxu0
        %v1316 = vadd.f32 0.0, %v1315
        %v1317 = vpop.f32.mrb[0].mxu0
        %1318 = vmatprep.mubr.bf16.mxu0 0
        %1319 = vmatmul.mubr.bf16.gmra.mrb[0].mxu0 %v1230
        %v1320 = vpop.f32.mrb[0].mxu0
        %v1321 = vadd.f32 0.0, %v1320
        %v1322 = vpop.f32.mrb[0].mxu0
        %v1323 = vpop.f32.mrb[0].mxu0
        %v1324 = vadd.f32 0.0, %v1323
        %v1325 = vpop.f32.mrb[0].mxu0
        %1326 = vmatprep.mubr.bf16.mxu0 0
        %1327 = vmatmul.mubr.bf16.gmra.mrb[0].mxu0 %v1233
        %v1328 = vpop.f32.mrb[0].mxu0
        %v1329 = vadd.f32 0.0, %v1328
        %v1330 = vpop.f32.mrb[0].mxu0
        %v1331 = vpop.f32.mrb[0].mxu0
        %v1332 = vadd.f32 0.0, %v1331
        %v1333 = vpop.f32.mrb[0].mxu0
        %1334 = vdwg.mxu0
        %1336 = vrot.lane.b32.xlu0 %v1174, 124
        %v1337 = vpop.permute.xlu0 %1336
        %v1339 = vsel %vm848, %v1337, 0
        %v1342 = vsel %vm873, %v1183, 0
        %1344 = vmatprep.subr.bf16.mxu0 0
        %1345 = vmatpush1.bf16.msra.mxu0 %v1342
        %1346 = vmatprep.subr.bf16.mxu0 0
        %1347 = vmatpush1.bf16.msra.mxu0 0
        %1348 = vmatprep.subr.bf16.mxu0 0
        %1349 = vmatpush1.bf16.msra.mxu0 0
        %1350 = vmatprep.subr.bf16.mxu0 0
        %1351 = vmatpush1.bf16.msra.mxu0 0
        %1352 = vmatprep.subr.bf16.mxu0 0
        %1353 = vmatpush1.bf16.msra.mxu0 0
        %1354 = vmatprep.subr.bf16.mxu0 0
        %1355 = vmatpush1.bf16.msra.mxu0 0
        %1356 = vmatprep.subr.bf16.mxu0 0
        %1357 = vmatpush1.bf16.msra.mxu0 0
        %1358 = vmatprep.subr.bf16.mxu0 0
        %1359 = vmatpush1.bf16.msra.mxu0 0
        %1360 = vmatprep.subr.bf16.mxu0 0
        %1361 = vmatpush1.bf16.msra.mxu0 0
        %1362 = vmatprep.subr.bf16.mxu0 0
        %1363 = vmatpush1.bf16.msra.mxu0 0
        %1364 = vmatprep.subr.bf16.mxu0 0
        %1365 = vmatpush1.bf16.msra.mxu0 0
        %1366 = vmatprep.subr.bf16.mxu0 0
        %1367 = vmatpush1.bf16.msra.mxu0 0
        %1368 = vmatprep.subr.bf16.mxu0 0
        %1369 = vmatpush1.bf16.msra.mxu0 0
        %1370 = vmatprep.subr.bf16.mxu0 0
        %1371 = vmatpush1.bf16.msra.mxu0 0
        %1372 = vmatprep.subr.bf16.mxu0 0
        %1373 = vmatpush1.bf16.msra.mxu0 0
        %1374 = vmatprep.subr.bf16.mxu0 0
        %1375 = vmatpush1.bf16.msra.mxu0 0
        %1376 = vmatprep.mubr.bf16.mxu0 0
        %1377 = vmatmul.mubr.bf16.gmra.mrb[0].mxu0 %v1339
        %v1378 = vpop.f32.mrb[0].mxu0
        %v1379 = vadd.f32 %v1273, %v1378
        %v1380 = vpop.f32.mrb[0].mxu0
        %v1381 = vpop.f32.mrb[0].mxu0
        %v1382 = vadd.f32 %v1276, %v1381
        %v1383 = vpop.f32.mrb[0].mxu0
        %1384 = vmatprep.mubr.bf16.mxu0 0
        %1385 = vmatmul.mubr.bf16.gmra.mrb[0].mxu0 %v1212
        %v1386 = vpop.f32.mrb[0].mxu0
        %v1387 = vadd.f32 %v1281, %v1386
        %v1388 = vpop.f32.mrb[0].mxu0
        %v1389 = vpop.f32.mrb[0].mxu0
        %v1390 = vadd.f32 %v1284, %v1389
        %v1391 = vpop.f32.mrb[0].mxu0
        %1392 = vmatprep.mubr.bf16.mxu0 0
        %1393 = vmatmul.mubr.bf16.gmra.mrb[0].mxu0 %v1215
        %v1394 = vpop.f32.mrb[0].mxu0
        %v1395 = vadd.f32 %v1289, %v1394
        %v1396 = vpop.f32.mrb[0].mxu0
        %v1397 = vpop.f32.mrb[0].mxu0
        %v1398 = vadd.f32 %v1292, %v1397
        %v1399 = vpop.f32.mrb[0].mxu0
        %1400 = vmatprep.mubr.bf16.mxu0 0
        %1401 = vmatmul.mubr.bf16.gmra.mrb[0].mxu0 %v1218
        %v1402 = vpop.f32.mrb[0].mxu0
        %v1403 = vadd.f32 %v1297, %v1402
        %v1404 = vpop.f32.mrb[0].mxu0
        %v1405 = vpop.f32.mrb[0].mxu0
        %v1406 = vadd.f32 %v1300, %v1405
        %v1407 = vpop.f32.mrb[0].mxu0
        %1408 = vmatprep.mubr.bf16.mxu0 0
        %1409 = vmatmul.mubr.bf16.gmra.mrb[0].mxu0 %v1221
        %v1410 = vpop.f32.mrb[0].mxu0
        %v1411 = vadd.f32 %v1305, %v1410
        %v1412 = vpop.f32.mrb[0].mxu0
        %v1413 = vpop.f32.mrb[0].mxu0
        %v1414 = vadd.f32 %v1308, %v1413
        %v1415 = vpop.f32.mrb[0].mxu0
        %1416 = vmatprep.mubr.bf16.mxu0 0
        %1417 = vmatmul.mubr.bf16.gmra.mrb[0].mxu0 %v1224
        %v1418 = vpop.f32.mrb[0].mxu0
        %v1419 = vadd.f32 %v1313, %v1418
        %v1420 = vpop.f32.mrb[0].mxu0
        %v1421 = vpop.f32.mrb[0].mxu0
        %v1422 = vadd.f32 %v1316, %v1421
        %v1423 = vpop.f32.mrb[0].mxu0
        %1424 = vmatprep.mubr.bf16.mxu0 0
        %1425 = vmatmul.mubr.bf16.gmra.mrb[0].mxu0 %v1227
        %v1426 = vpop.f32.mrb[0].mxu0
        %v1427 = vadd.f32 %v1321, %v1426
        %v1428 = vpop.f32.mrb[0].mxu0
        %v1429 = vpop.f32.mrb[0].mxu0
        %v1430 = vadd.f32 %v1324, %v1429
        %v1431 = vpop.f32.mrb[0].mxu0
        %1432 = vmatprep.mubr.bf16.mxu0 0
        %1433 = vmatmul.mubr.bf16.gmra.mrb[0].mxu0 %v1230
        %v1434 = vpop.f32.mrb[0].mxu0
        %v1435 = vadd.f32 %v1329, %v1434
        %v1436 = vpop.f32.mrb[0].mxu0
        %v1437 = vpop.f32.mrb[0].mxu0
        %v1438 = vadd.f32 %v1332, %v1437
        %v1439 = vpop.f32.mrb[0].mxu0
        %1440 = vdwg.mxu0
        %v1441 = vmax.f32 %v1379, 0.0
        %v1442 = vmax.f32 %v1382, 0.0
        %v1443 = vmax.f32 %v1387, 0.0
        %v1444 = vmax.f32 %v1390, 0.0
        %v1445 = vmax.f32 %v1395, 0.0
        %v1446 = vmax.f32 %v1398, 0.0
        %v1447 = vmax.f32 %v1403, 0.0
        %v1448 = vmax.f32 %v1406, 0.0
        %v1449 = vmax.f32 %v1411, 0.0
        %v1450 = vmax.f32 %v1414, 0.0
        %v1451 = vmax.f32 %v1419, 0.0
        %v1452 = vmax.f32 %v1422, 0.0
        %v1453 = vmax.f32 %v1427, 0.0
        %v1454 = vmax.f32 %v1430, 0.0
        %v1455 = vmax.f32 %v1435, 0.0
        %v1456 = vmax.f32 %v1438, 0.0
        %v1457 = vpack.c.bf16 %v1442, %v1441
        %v1458 = vpack.c.bf16 %v1444, %v1443
        %v1459 = vpack.c.bf16 %v1446, %v1445
        %v1460 = vpack.c.bf16 %v1448, %v1447
        %v1461 = vpack.c.bf16 %v1450, %v1449
        %v1462 = vpack.c.bf16 %v1452, %v1451
        %v1463 = vpack.c.bf16 %v1454, %v1453
        %v1464 = vpack.c.bf16 %v1456, %v1455
        %v1473 = vunpack.c.l.b16 %v1457
        %v1474 = vunpack.c.h.b16 %v1457
        %v1475 = vunpack.c.l.b16 %v1458
        %v1476 = vunpack.c.h.b16 %v1458
        %v1477 = vunpack.c.l.b16 %v1459
        %v1478 = vunpack.c.h.b16 %v1459
        %v1479 = vunpack.c.l.b16 %v1460
        %v1480 = vunpack.c.h.b16 %v1460
        %v1481 = vunpack.c.l.b16 %v1461
        %v1482 = vunpack.c.h.b16 %v1461
        %v1483 = vunpack.c.l.b16 %v1462
        %v1484 = vunpack.c.h.b16 %v1462
        %v1485 = vunpack.c.l.b16 %v1463
        %v1486 = vunpack.c.h.b16 %v1463
        %v1487 = vunpack.c.l.b16 %v1464
        %v1488 = vunpack.c.h.b16 %v1464
        %v1489 = vpack.c.b16 %v1473, %v1473
        %v1490 = vpack.c.b16 %v1474, %v1474
        %v1491 = vpack.c.b16 %v1475, %v1475
        %v1492 = vpack.c.b16 %v1476, %v1476
        %v1493 = vpack.c.b16 %v1477, %v1477
        %v1494 = vpack.c.b16 %v1478, %v1478
        %v1495 = vpack.c.b16 %v1479, %v1479
        %v1496 = vpack.c.b16 %v1480, %v1480
        %v1497 = vpack.c.b16 %v1481, %v1481
        %v1498 = vpack.c.b16 %v1482, %v1482
        %v1499 = vpack.c.b16 %v1483, %v1483
        %v1500 = vpack.c.b16 %v1484, %v1484
        %v1501 = vpack.c.b16 %v1485, %v1485
        %v1502 = vpack.c.b16 %v1486, %v1486
        %v1503 = vpack.c.b16 %v1487, %v1487
        %v1504 = vpack.c.b16 %v1488, %v1488
        %1505 = vrot.lane.b32.xlu0 %v1489, 8
        %v1506 = vpop.permute.xlu0 %1505
        %1507 = vrot.lane.b32.xlu0 %v1490, 8
        %v1508 = vpop.permute.xlu0 %1507
        %1509 = vrot.lane.b32.xlu0 %v1491, 8
        %v1510 = vpop.permute.xlu0 %1509
        %1511 = vrot.lane.b32.xlu0 %v1492, 8
        %v1512 = vpop.permute.xlu0 %1511
        %1513 = vrot.lane.b32.xlu0 %v1493, 8
        %v1514 = vpop.permute.xlu0 %1513
        %1515 = vrot.lane.b32.xlu0 %v1494, 8
        %v1516 = vpop.permute.xlu0 %1515
        %1517 = vrot.lane.b32.xlu0 %v1495, 8
        %v1518 = vpop.permute.xlu0 %1517
        %1519 = vrot.lane.b32.xlu0 %v1496, 8
        %v1520 = vpop.permute.xlu0 %1519
        %1521 = vrot.lane.b32.xlu0 %v1497, 8
        %v1522 = vpop.permute.xlu0 %1521
        %1523 = vrot.lane.b32.xlu0 %v1498, 8
        %v1524 = vpop.permute.xlu0 %1523
        %1525 = vrot.lane.b32.xlu0 %v1499, 8
        %v1526 = vpop.permute.xlu0 %1525
        %1527 = vrot.lane.b32.xlu0 %v1500, 8
        %v1528 = vpop.permute.xlu0 %1527
        %1529 = vrot.lane.b32.xlu0 %v1501, 8
        %v1530 = vpop.permute.xlu0 %1529
        %1531 = vrot.lane.b32.xlu0 %v1502, 8
        %v1532 = vpop.permute.xlu0 %1531
        %1533 = vrot.lane.b32.xlu0 %v1503, 8
        %v1534 = vpop.permute.xlu0 %1533
        %1535 = vrot.lane.b32.xlu0 %v1504, 8
        %v1536 = vpop.permute.xlu0 %1535
        %vm1553 = vcmask 126016
        %1554 = vst.msk [vmem:[%s190] sm:$0xf] %vm1553, %v1506
        %1555 = vst.msk [vmem:[%s190 + $0x4] sm:$0xf] %vm1553, %v1508
        %1556 = vst.msk [vmem:[%s190 + $0x10] sm:$0xf] %vm1553, %v1510
        %1557 = vst.msk [vmem:[%s190 + $0x14] sm:$0xf] %vm1553, %v1512
        %1558 = vst.msk [vmem:[%s190 + $0x20] sm:$0xf] %vm1553, %v1514
        %1559 = vst.msk [vmem:[%s190 + $0x24] sm:$0xf] %vm1553, %v1516
        %1560 = vst.msk [vmem:[%s190 + $0x30] sm:$0xf] %vm1553, %v1518
        %1561 = vst.msk [vmem:[%s190 + $0x34] sm:$0xf] %vm1553, %v1520
        %1562 = vst.msk [vmem:[%s190 + $0x40] sm:$0xf] %vm1553, %v1522
        %1563 = vst.msk [vmem:[%s190 + $0x44] sm:$0xf] %vm1553, %v1524
        %1564 = vst.msk [vmem:[%s190 + $0x50] sm:$0xf] %vm1553, %v1526
        %1565 = vst.msk [vmem:[%s190 + $0x54] sm:$0xf] %vm1553, %v1528
        %1566 = vst.msk [vmem:[%s190 + $0x60] sm:$0xf] %vm1553, %v1530
        %1567 = vst.msk [vmem:[%s190 + $0x64] sm:$0xf] %vm1553, %v1532
        %1568 = vst.msk [vmem:[%s190 + $0x70] sm:$0xf] %vm1553, %v1534
        %1569 = vst.msk [vmem:[%s190 + $0x74] sm:$0xf] %vm1553, %v1536
        %v1570 = vld [vmem:[#allocation2 + $0x8] sm:$0xff]
        %v1571 = vld [vmem:[#allocation2 + $0x10] sm:$0xff]
        %v1572 = vld [vmem:[#allocation2 + $0x18] sm:$0xff]
        %v1573 = vld [vmem:[#allocation2 + $0x20] sm:$0xff]
        %v1574 = vld [vmem:[#allocation2 + $0x28] sm:$0xff]
        %v1575 = vld [vmem:[#allocation2 + $0x30] sm:$0xff]
        %v1576 = vld [vmem:[#allocation2 + $0x38] sm:$0xff]
        %v1577 = vld [vmem:[#allocation2 + $0x40] sm:$0xff]
        %s1578 = scalar_lea.vmem [#allocation6], 16
        %v1579 = vld [vmem:[%s1578] sm:$0xf]
        %v1580 = vld [vmem:[#allocation2 + $0x48] sm:$0xff]
        %s1581 = scalar_lea.vmem [#allocation6], 24
        %v1582 = vld [vmem:[%s1581] sm:$0xf]
        %v1584 = vsel %vm848, %v1571, 0
        %v1587 = vsel %vm848, %v1572, 0
        %v1590 = vsel %vm848, %v1573, 0
        %v1593 = vsel %vm848, %v1574, 0
        %v1596 = vsel %vm848, %v1575, 0
        %v1599 = vsel %vm848, %v1576, 0
        %v1602 = vsel %vm848, %v1577, 0
        %v1605 = vsel %vm848, %v1580, 0
        %v1608 = vsel %vm873, %v1582, 0
        %1610 = vmatprep.subr.bf16.mxu0 0
        %1611 = vmatpush1.bf16.msra.mxu0 %v1608
        %1612 = vmatprep.subr.bf16.mxu0 0
        %1613 = vmatpush1.bf16.msra.mxu0 0
        %1614 = vmatprep.subr.bf16.mxu0 0
        %1615 = vmatpush1.bf16.msra.mxu0 0
        %1616 = vmatprep.subr.bf16.mxu0 0
        %1617 = vmatpush1.bf16.msra.mxu0 0
        %1618 = vmatprep.subr.bf16.mxu0 0
        %1619 = vmatpush1.bf16.msra.mxu0 0
        %1620 = vmatprep.subr.bf16.mxu0 0
        %1621 = vmatpush1.bf16.msra.mxu0 0
        %1622 = vmatprep.subr.bf16.mxu0 0
        %1623 = vmatpush1.bf16.msra.mxu0 0
        %1624 = vmatprep.subr.bf16.mxu0 0
        %1625 = vmatpush1.bf16.msra.mxu0 0
        %1626 = vmatprep.subr.bf16.mxu0 0
        %1627 = vmatpush1.bf16.msra.mxu0 0
        %1628 = vmatprep.subr.bf16.mxu0 0
        %1629 = vmatpush1.bf16.msra.mxu0 0
        %1630 = vmatprep.subr.bf16.mxu0 0
        %1631 = vmatpush1.bf16.msra.mxu0 0
        %1632 = vmatprep.subr.bf16.mxu0 0
        %1633 = vmatpush1.bf16.msra.mxu0 0
        %1634 = vmatprep.subr.bf16.mxu0 0
        %1635 = vmatpush1.bf16.msra.mxu0 0
        %1636 = vmatprep.subr.bf16.mxu0 0
        %1637 = vmatpush1.bf16.msra.mxu0 0
        %1638 = vmatprep.subr.bf16.mxu0 0
        %1639 = vmatpush1.bf16.msra.mxu0 0
        %1640 = vmatprep.subr.bf16.mxu0 0
        %1641 = vmatpush1.bf16.msra.mxu0 0
        %1642 = vmatprep.mubr.bf16.mxu0 0
        %1643 = vmatmul.mubr.bf16.gmra.mrb[0].mxu0 %v1584
        %v1644 = vpop.f32.mrb[0].mxu0
        %v1645 = vadd.f32 0.0, %v1644
        %v1646 = vpop.f32.mrb[0].mxu0
        %v1647 = vpop.f32.mrb[0].mxu0
        %v1648 = vadd.f32 0.0, %v1647
        %v1649 = vpop.f32.mrb[0].mxu0
        %1650 = vmatprep.mubr.bf16.mxu0 0
        %1651 = vmatmul.mubr.bf16.gmra.mrb[0].mxu0 %v1587
        %v1652 = vpop.f32.mrb[0].mxu0
        %v1653 = vadd.f32 0.0, %v1652
        %v1654 = vpop.f32.mrb[0].mxu0
        %v1655 = vpop.f32.mrb[0].mxu0
        %v1656 = vadd.f32 0.0, %v1655
        %v1657 = vpop.f32.mrb[0].mxu0
        %1658 = vmatprep.mubr.bf16.mxu0 0
        %1659 = vmatmul.mubr.bf16.gmra.mrb[0].mxu0 %v1590
        %v1660 = vpop.f32.mrb[0].mxu0
        %v1661 = vadd.f32 0.0, %v1660
        %v1662 = vpop.f32.mrb[0].mxu0
        %v1663 = vpop.f32.mrb[0].mxu0
        %v1664 = vadd.f32 0.0, %v1663
        %v1665 = vpop.f32.mrb[0].mxu0
        %1666 = vmatprep.mubr.bf16.mxu0 0
        %1667 = vmatmul.mubr.bf16.gmra.mrb[0].mxu0 %v1593
        %v1668 = vpop.f32.mrb[0].mxu0
        %v1669 = vadd.f32 0.0, %v1668
        %v1670 = vpop.f32.mrb[0].mxu0
        %v1671 = vpop.f32.mrb[0].mxu0
        %v1672 = vadd.f32 0.0, %v1671
        %v1673 = vpop.f32.mrb[0].mxu0
        %1674 = vmatprep.mubr.bf16.mxu0 0
        %1675 = vmatmul.mubr.bf16.gmra.mrb[0].mxu0 %v1596
        %v1676 = vpop.f32.mrb[0].mxu0
        %v1677 = vadd.f32 0.0, %v1676
        %v1678 = vpop.f32.mrb[0].mxu0
        %v1679 = vpop.f32.mrb[0].mxu0
        %v1680 = vadd.f32 0.0, %v1679
        %v1681 = vpop.f32.mrb[0].mxu0
        %1682 = vmatprep.mubr.bf16.mxu0 0
        %1683 = vmatmul.mubr.bf16.gmra.mrb[0].mxu0 %v1599
        %v1684 = vpop.f32.mrb[0].mxu0
        %v1685 = vadd.f32 0.0, %v1684
        %v1686 = vpop.f32.mrb[0].mxu0
        %v1687 = vpop.f32.mrb[0].mxu0
        %v1688 = vadd.f32 0.0, %v1687
        %v1689 = vpop.f32.mrb[0].mxu0
        %1690 = vmatprep.mubr.bf16.mxu0 0
        %1691 = vmatmul.mubr.bf16.gmra.mrb[0].mxu0 %v1602
        %v1692 = vpop.f32.mrb[0].mxu0
        %v1693 = vadd.f32 0.0, %v1692
        %v1694 = vpop.f32.mrb[0].mxu0
        %v1695 = vpop.f32.mrb[0].mxu0
        %v1696 = vadd.f32 0.0, %v1695
        %v1697 = vpop.f32.mrb[0].mxu0
        %1698 = vmatprep.mubr.bf16.mxu0 0
        %1699 = vmatmul.mubr.bf16.gmra.mrb[0].mxu0 %v1605
        %v1700 = vpop.f32.mrb[0].mxu0
        %v1701 = vadd.f32 0.0, %v1700
        %v1702 = vpop.f32.mrb[0].mxu0
        %v1703 = vpop.f32.mrb[0].mxu0
        %v1704 = vadd.f32 0.0, %v1703
        %v1705 = vpop.f32.mrb[0].mxu0
        %1706 = vdwg.mxu0
        %v1708 = vsel %vm848, %v1570, 0
        %v1711 = vsel %vm873, %v1579, 0
        %1713 = vmatprep.subr.bf16.mxu0 0
        %1714 = vmatpush1.bf16.msra.mxu0 %v1711
        %1715 = vmatprep.subr.bf16.mxu0 0
        %1716 = vmatpush1.bf16.msra.mxu0 0
        %1717 = vmatprep.subr.bf16.mxu0 0
        %1718 = vmatpush1.bf16.msra.mxu0 0
        %1719 = vmatprep.subr.bf16.mxu0 0
        %1720 = vmatpush1.bf16.msra.mxu0 0
        %1721 = vmatprep.subr.bf16.mxu0 0
        %1722 = vmatpush1.bf16.msra.mxu0 0
        %1723 = vmatprep.subr.bf16.mxu0 0
        %1724 = vmatpush1.bf16.msra.mxu0 0
        %1725 = vmatprep.subr.bf16.mxu0 0
        %1726 = vmatpush1.bf16.msra.mxu0 0
        %1727 = vmatprep.subr.bf16.mxu0 0
        %1728 = vmatpush1.bf16.msra.mxu0 0
        %1729 = vmatprep.subr.bf16.mxu0 0
        %1730 = vmatpush1.bf16.msra.mxu0 0
        %1731 = vmatprep.subr.bf16.mxu0 0
        %1732 = vmatpush1.bf16.msra.mxu0 0
        %1733 = vmatprep.subr.bf16.mxu0 0
        %1734 = vmatpush1.bf16.msra.mxu0 0
        %1735 = vmatprep.subr.bf16.mxu0 0
        %1736 = vmatpush1.bf16.msra.mxu0 0
        %1737 = vmatprep.subr.bf16.mxu0 0
        %1738 = vmatpush1.bf16.msra.mxu0 0
        %1739 = vmatprep.subr.bf16.mxu0 0
        %1740 = vmatpush1.bf16.msra.mxu0 0
        %1741 = vmatprep.subr.bf16.mxu0 0
        %1742 = vmatpush1.bf16.msra.mxu0 0
        %1743 = vmatprep.subr.bf16.mxu0 0
        %1744 = vmatpush1.bf16.msra.mxu0 0
        %1745 = vmatprep.mubr.bf16.mxu0 0
        %1746 = vmatmul.mubr.bf16.gmra.mrb[0].mxu0 %v1708
        %v1747 = vpop.f32.mrb[0].mxu0
        %v1748 = vadd.f32 %v1645, %v1747
        %v1749 = vpop.f32.mrb[0].mxu0
        %v1750 = vpop.f32.mrb[0].mxu0
        %v1751 = vadd.f32 %v1648, %v1750
        %v1752 = vpop.f32.mrb[0].mxu0
        %1753 = vmatprep.mubr.bf16.mxu0 0
        %1754 = vmatmul.mubr.bf16.gmra.mrb[0].mxu0 %v1584
        %v1755 = vpop.f32.mrb[0].mxu0
        %v1756 = vadd.f32 %v1653, %v1755
        %v1757 = vpop.f32.mrb[0].mxu0
        %v1758 = vpop.f32.mrb[0].mxu0
        %v1759 = vadd.f32 %v1656, %v1758
        %v1760 = vpop.f32.mrb[0].mxu0
        %1761 = vmatprep.mubr.bf16.mxu0 0
        %1762 = vmatmul.mubr.bf16.gmra.mrb[0].mxu0 %v1587
        %v1763 = vpop.f32.mrb[0].mxu0
        %v1764 = vadd.f32 %v1661, %v1763
        %v1765 = vpop.f32.mrb[0].mxu0
        %v1766 = vpop.f32.mrb[0].mxu0
        %v1767 = vadd.f32 %v1664, %v1766
        %v1768 = vpop.f32.mrb[0].mxu0
        %1769 = vmatprep.mubr.bf16.mxu0 0
        %1770 = vmatmul.mubr.bf16.gmra.mrb[0].mxu0 %v1590
        %v1771 = vpop.f32.mrb[0].mxu0
        %v1772 = vadd.f32 %v1669, %v1771
        %v1773 = vpop.f32.mrb[0].mxu0
        %v1774 = vpop.f32.mrb[0].mxu0
        %v1775 = vadd.f32 %v1672, %v1774
        %v1776 = vpop.f32.mrb[0].mxu0
        %1777 = vmatprep.mubr.bf16.mxu0 0
        %1778 = vmatmul.mubr.bf16.gmra.mrb[0].mxu0 %v1593
        %v1779 = vpop.f32.mrb[0].mxu0
        %v1780 = vadd.f32 %v1677, %v1779
        %v1781 = vpop.f32.mrb[0].mxu0
        %v1782 = vpop.f32.mrb[0].mxu0
        %v1783 = vadd.f32 %v1680, %v1782
        %v1784 = vpop.f32.mrb[0].mxu0
        %1785 = vmatprep.mubr.bf16.mxu0 0
        %1786 = vmatmul.mubr.bf16.gmra.mrb[0].mxu0 %v1596
        %v1787 = vpop.f32.mrb[0].mxu0
        %v1788 = vadd.f32 %v1685, %v1787
        %v1789 = vpop.f32.mrb[0].mxu0
        %v1790 = vpop.f32.mrb[0].mxu0
        %v1791 = vadd.f32 %v1688, %v1790
        %v1792 = vpop.f32.mrb[0].mxu0
        %1793 = vmatprep.mubr.bf16.mxu0 0
        %1794 = vmatmul.mubr.bf16.gmra.mrb[0].mxu0 %v1599
        %v1795 = vpop.f32.mrb[0].mxu0
        %v1796 = vadd.f32 %v1693, %v1795
        %v1797 = vpop.f32.mrb[0].mxu0
        %v1798 = vpop.f32.mrb[0].mxu0
        %v1799 = vadd.f32 %v1696, %v1798
        %v1800 = vpop.f32.mrb[0].mxu0
        %1801 = vmatprep.mubr.bf16.mxu0 0
        %1802 = vmatmul.mubr.bf16.gmra.mrb[0].mxu0 %v1602
        %v1803 = vpop.f32.mrb[0].mxu0
        %v1804 = vadd.f32 %v1701, %v1803
        %v1805 = vpop.f32.mrb[0].mxu0
        %v1806 = vpop.f32.mrb[0].mxu0
        %v1807 = vadd.f32 %v1704, %v1806
        %v1808 = vpop.f32.mrb[0].mxu0
        %1809 = vdwg.mxu0
        %v1810 = vmax.f32 %v1748, 0.0
        %v1811 = vmax.f32 %v1751, 0.0
        %v1812 = vmax.f32 %v1756, 0.0
        %v1813 = vmax.f32 %v1759, 0.0
        %v1814 = vmax.f32 %v1764, 0.0
        %v1815 = vmax.f32 %v1767, 0.0
        %v1816 = vmax.f32 %v1772, 0.0
        %v1817 = vmax.f32 %v1775, 0.0
        %v1818 = vmax.f32 %v1780, 0.0
        %v1819 = vmax.f32 %v1783, 0.0
        %v1820 = vmax.f32 %v1788, 0.0
        %v1821 = vmax.f32 %v1791, 0.0
        %v1822 = vmax.f32 %v1796, 0.0
        %v1823 = vmax.f32 %v1799, 0.0
        %v1824 = vmax.f32 %v1804, 0.0
        %v1825 = vmax.f32 %v1807, 0.0
        %v1826 = vpack.c.bf16 %v1811, %v1810
        %v1827 = vpack.c.bf16 %v1813, %v1812
        %v1828 = vpack.c.bf16 %v1815, %v1814
        %v1829 = vpack.c.bf16 %v1817, %v1816
        %v1830 = vpack.c.bf16 %v1819, %v1818
        %v1831 = vpack.c.bf16 %v1821, %v1820
        %v1832 = vpack.c.bf16 %v1823, %v1822
        %v1833 = vpack.c.bf16 %v1825, %v1824
        %v1842 = vunpack.c.l.b16 %v1826
        %v1843 = vunpack.c.h.b16 %v1826
        %v1844 = vunpack.c.l.b16 %v1827
        %v1845 = vunpack.c.h.b16 %v1827
        %v1846 = vunpack.c.l.b16 %v1828
        %v1847 = vunpack.c.h.b16 %v1828
        %v1848 = vunpack.c.l.b16 %v1829
        %v1849 = vunpack.c.h.b16 %v1829
        %v1850 = vunpack.c.l.b16 %v1830
        %v1851 = vunpack.c.h.b16 %v1830
        %v1852 = vunpack.c.l.b16 %v1831
        %v1853 = vunpack.c.h.b16 %v1831
        %v1854 = vunpack.c.l.b16 %v1832
        %v1855 = vunpack.c.h.b16 %v1832
        %v1856 = vunpack.c.l.b16 %v1833
        %v1857 = vunpack.c.h.b16 %v1833
        %v1858 = vpack.c.b16 %v1842, %v1842
        %v1859 = vpack.c.b16 %v1843, %v1843
        %v1860 = vpack.c.b16 %v1844, %v1844
        %v1861 = vpack.c.b16 %v1845, %v1845
        %v1862 = vpack.c.b16 %v1846, %v1846
        %v1863 = vpack.c.b16 %v1847, %v1847
        %v1864 = vpack.c.b16 %v1848, %v1848
        %v1865 = vpack.c.b16 %v1849, %v1849
        %v1866 = vpack.c.b16 %v1850, %v1850
        %v1867 = vpack.c.b16 %v1851, %v1851
        %v1868 = vpack.c.b16 %v1852, %v1852
        %v1869 = vpack.c.b16 %v1853, %v1853
        %v1870 = vpack.c.b16 %v1854, %v1854
        %v1871 = vpack.c.b16 %v1855, %v1855
        %v1872 = vpack.c.b16 %v1856, %v1856
        %v1873 = vpack.c.b16 %v1857, %v1857
        %s1890 = scalar_lea.vmem %s190, 8 [#allocation8]
        %1891 = vst.msk [vmem:[%s1890] sm:$0xf] %vm1157, %v1858
        %1892 = vst.msk [vmem:[%s1890 + $0x4] sm:$0xf] %vm1157, %v1859
        %1893 = vst.msk [vmem:[%s1890 + $0x10] sm:$0xf] %vm1157, %v1860
        %1894 = vst.msk [vmem:[%s1890 + $0x14] sm:$0xf] %vm1157, %v1861
        %1895 = vst.msk [vmem:[%s1890 + $0x20] sm:$0xf] %vm1157, %v1862
        %1896 = vst.msk [vmem:[%s1890 + $0x24] sm:$0xf] %vm1157, %v1863
        %1897 = vst.msk [vmem:[%s1890 + $0x30] sm:$0xf] %vm1157, %v1864
        %1898 = vst.msk [vmem:[%s1890 + $0x34] sm:$0xf] %vm1157, %v1865
        %1899 = vst.msk [vmem:[%s1890 + $0x40] sm:$0xf] %vm1157, %v1866
        %1900 = vst.msk [vmem:[%s1890 + $0x44] sm:$0xf] %vm1157, %v1867
        %1901 = vst.msk [vmem:[%s1890 + $0x50] sm:$0xf] %vm1157, %v1868
        %1902 = vst.msk [vmem:[%s1890 + $0x54] sm:$0xf] %vm1157, %v1869
        %1903 = vst.msk [vmem:[%s1890 + $0x60] sm:$0xf] %vm1157, %v1870
        %1904 = vst.msk [vmem:[%s1890 + $0x64] sm:$0xf] %vm1157, %v1871
        %1905 = vst.msk [vmem:[%s1890 + $0x70] sm:$0xf] %vm1157, %v1872
        %1906 = vst.msk [vmem:[%s1890 + $0x74] sm:$0xf] %vm1157, %v1873
        %v1907 = vld [vmem:[#allocation2 + $0x8] sm:$0xff]
        %v1908 = vld [vmem:[#allocation2 + $0x10] sm:$0xff]
        %v1909 = vld [vmem:[#allocation2 + $0x18] sm:$0xff]
        %v1910 = vld [vmem:[#allocation2 + $0x20] sm:$0xff]
        %v1911 = vld [vmem:[#allocation2 + $0x28] sm:$0xff]
        %v1912 = vld [vmem:[#allocation2 + $0x30] sm:$0xff]
        %v1913 = vld [vmem:[#allocation2 + $0x38] sm:$0xff]
        %v1914 = vld [vmem:[#allocation2 + $0x40] sm:$0xff]
        %s1915 = scalar_lea.vmem [#allocation6], 20
        %v1916 = vld [vmem:[%s1915] sm:$0xf]
        %v1917 = vld [vmem:[#allocation2 + $0x48] sm:$0xff]
        %s1918 = scalar_lea.vmem [#allocation6], 28
        %v1919 = vld [vmem:[%s1918] sm:$0xf]
        %1928 = vrot.lane.b32.xlu0 %v1908, 124
        %v1929 = vpop.permute.xlu0 %1928
        %1930 = vrot.lane.b32.xlu0 %v1909, 124
        %v1931 = vpop.permute.xlu0 %1930
        %1932 = vrot.lane.b32.xlu0 %v1910, 124
        %v1933 = vpop.permute.xlu0 %1932
        %1934 = vrot.lane.b32.xlu0 %v1911, 124
        %v1935 = vpop.permute.xlu0 %1934
        %1936 = vrot.lane.b32.xlu0 %v1912, 124
        %v1937 = vpop.permute.xlu0 %1936
        %1938 = vrot.lane.b32.xlu0 %v1913, 124
        %v1939 = vpop.permute.xlu0 %1938
        %1940 = vrot.lane.b32.xlu0 %v1914, 124
        %v1941 = vpop.permute.xlu0 %1940
        %1942 = vrot.lane.b32.xlu0 %v1917, 124
        %v1943 = vpop.permute.xlu0 %1942
        %v1945 = vsel %vm848, %v1929, 0
        %v1948 = vsel %vm848, %v1931, 0
        %v1951 = vsel %vm848, %v1933, 0
        %v1954 = vsel %vm848, %v1935, 0
        %v1957 = vsel %vm848, %v1937, 0
        %v1960 = vsel %vm848, %v1939, 0
        %v1963 = vsel %vm848, %v1941, 0
        %v1966 = vsel %vm848, %v1943, 0
        %v1969 = vsel %vm873, %v1919, 0
        %1971 = vmatprep.subr.bf16.mxu0 0
        %1972 = vmatpush1.bf16.msra.mxu0 %v1969
        %1973 = vmatprep.subr.bf16.mxu0 0
        %1974 = vmatpush1.bf16.msra.mxu0 0
        %1975 = vmatprep.subr.bf16.mxu0 0
        %1976 = vmatpush1.bf16.msra.mxu0 0
        %1977 = vmatprep.subr.bf16.mxu0 0
        %1978 = vmatpush1.bf16.msra.mxu0 0
        %1979 = vmatprep.subr.bf16.mxu0 0
        %1980 = vmatpush1.bf16.msra.mxu0 0
        %1981 = vmatprep.subr.bf16.mxu0 0
        %1982 = vmatpush1.bf16.msra.mxu0 0
        %1983 = vmatprep.subr.bf16.mxu0 0
        %1984 = vmatpush1.bf16.msra.mxu0 0
        %1985 = vmatprep.subr.bf16.mxu0 0
        %1986 = vmatpush1.bf16.msra.mxu0 0
        %1987 = vmatprep.subr.bf16.mxu0 0
        %1988 = vmatpush1.bf16.msra.mxu0 0
        %1989 = vmatprep.subr.bf16.mxu0 0
        %1990 = vmatpush1.bf16.msra.mxu0 0
        %1991 = vmatprep.subr.bf16.mxu0 0
        %1992 = vmatpush1.bf16.msra.mxu0 0
        %1993 = vmatprep.subr.bf16.mxu0 0
        %1994 = vmatpush1.bf16.msra.mxu0 0
        %1995 = vmatprep.subr.bf16.mxu0 0
        %1996 = vmatpush1.bf16.msra.mxu0 0
        %1997 = vmatprep.subr.bf16.mxu0 0
        %1998 = vmatpush1.bf16.msra.mxu0 0
        %1999 = vmatprep.subr.bf16.mxu0 0
        %2000 = vmatpush1.bf16.msra.mxu0 0
        %2001 = vmatprep.subr.bf16.mxu0 0
        %2002 = vmatpush1.bf16.msra.mxu0 0
        %2003 = vmatprep.mubr.bf16.mxu0 0
        %2004 = vmatmul.mubr.bf16.gmra.mrb[0].mxu0 %v1945
        %v2005 = vpop.f32.mrb[0].mxu0
        %v2006 = vadd.f32 0.0, %v2005
        %v2007 = vpop.f32.mrb[0].mxu0
        %v2008 = vpop.f32.mrb[0].mxu0
        %v2009 = vadd.f32 0.0, %v2008
        %v2010 = vpop.f32.mrb[0].mxu0
        %2011 = vmatprep.mubr.bf16.mxu0 0
        %2012 = vmatmul.mubr.bf16.gmra.mrb[0].mxu0 %v1948
        %v2013 = vpop.f32.mrb[0].mxu0
        %v2014 = vadd.f32 0.0, %v2013
        %v2015 = vpop.f32.mrb[0].mxu0
        %v2016 = vpop.f32.mrb[0].mxu0
        %v2017 = vadd.f32 0.0, %v2016
        %v2018 = vpop.f32.mrb[0].mxu0
        %2019 = vmatprep.mubr.bf16.mxu0 0
        %2020 = vmatmul.mubr.bf16.gmra.mrb[0].mxu0 %v1951
        %v2021 = vpop.f32.mrb[0].mxu0
        %v2022 = vadd.f32 0.0, %v2021
        %v2023 = vpop.f32.mrb[0].mxu0
        %v2024 = vpop.f32.mrb[0].mxu0
        %v2025 = vadd.f32 0.0, %v2024
        %v2026 = vpop.f32.mrb[0].mxu0
        %2027 = vmatprep.mubr.bf16.mxu0 0
        %2028 = vmatmul.mubr.bf16.gmra.mrb[0].mxu0 %v1954
        %v2029 = vpop.f32.mrb[0].mxu0
        %v2030 = vadd.f32 0.0, %v2029
        %v2031 = vpop.f32.mrb[0].mxu0
        %v2032 = vpop.f32.mrb[0].mxu0
        %v2033 = vadd.f32 0.0, %v2032
        %v2034 = vpop.f32.mrb[0].mxu0
        %2035 = vmatprep.mubr.bf16.mxu0 0
        %2036 = vmatmul.mubr.bf16.gmra.mrb[0].mxu0 %v1957
        %v2037 = vpop.f32.mrb[0].mxu0
        %v2038 = vadd.f32 0.0, %v2037
        %v2039 = vpop.f32.mrb[0].mxu0
        %v2040 = vpop.f32.mrb[0].mxu0
        %v2041 = vadd.f32 0.0, %v2040
        %v2042 = vpop.f32.mrb[0].mxu0
        %2043 = vmatprep.mubr.bf16.mxu0 0
        %2044 = vmatmul.mubr.bf16.gmra.mrb[0].mxu0 %v1960
        %v2045 = vpop.f32.mrb[0].mxu0
        %v2046 = vadd.f32 0.0, %v2045
        %v2047 = vpop.f32.mrb[0].mxu0
        %v2048 = vpop.f32.mrb[0].mxu0
        %v2049 = vadd.f32 0.0, %v2048
        %v2050 = vpop.f32.mrb[0].mxu0
        %2051 = vmatprep.mubr.bf16.mxu0 0
        %2052 = vmatmul.mubr.bf16.gmra.mrb[0].mxu0 %v1963
        %v2053 = vpop.f32.mrb[0].mxu0
        %v2054 = vadd.f32 0.0, %v2053
        %v2055 = vpop.f32.mrb[0].mxu0
        %v2056 = vpop.f32.mrb[0].mxu0
        %v2057 = vadd.f32 0.0, %v2056
        %v2058 = vpop.f32.mrb[0].mxu0
        %2059 = vmatprep.mubr.bf16.mxu0 0
        %2060 = vmatmul.mubr.bf16.gmra.mrb[0].mxu0 %v1966
        %v2061 = vpop.f32.mrb[0].mxu0
        %v2062 = vadd.f32 0.0, %v2061
        %v2063 = vpop.f32.mrb[0].mxu0
        %v2064 = vpop.f32.mrb[0].mxu0
        %v2065 = vadd.f32 0.0, %v2064
        %v2066 = vpop.f32.mrb[0].mxu0
        %2067 = vdwg.mxu0
        %2069 = vrot.lane.b32.xlu0 %v1907, 124
        %v2070 = vpop.permute.xlu0 %2069
        %v2072 = vsel %vm848, %v2070, 0
        %v2075 = vsel %vm873, %v1916, 0
        %2077 = vmatprep.subr.bf16.mxu0 0
        %2078 = vmatpush1.bf16.msra.mxu0 %v2075
        %2079 = vmatprep.subr.bf16.mxu0 0
        %2080 = vmatpush1.bf16.msra.mxu0 0
        %2081 = vmatprep.subr.bf16.mxu0 0
        %2082 = vmatpush1.bf16.msra.mxu0 0
        %2083 = vmatprep.subr.bf16.mxu0 0
        %2084 = vmatpush1.bf16.msra.mxu0 0
        %2085 = vmatprep.subr.bf16.mxu0 0
        %2086 = vmatpush1.bf16.msra.mxu0 0
        %2087 = vmatprep.subr.bf16.mxu0 0
        %2088 = vmatpush1.bf16.msra.mxu0 0
        %2089 = vmatprep.subr.bf16.mxu0 0
        %2090 = vmatpush1.bf16.msra.mxu0 0
        %2091 = vmatprep.subr.bf16.mxu0 0
        %2092 = vmatpush1.bf16.msra.mxu0 0
        %2093 = vmatprep.subr.bf16.mxu0 0
        %2094 = vmatpush1.bf16.msra.mxu0 0
        %2095 = vmatprep.subr.bf16.mxu0 0
        %2096 = vmatpush1.bf16.msra.mxu0 0
        %2097 = vmatprep.subr.bf16.mxu0 0
        %2098 = vmatpush1.bf16.msra.mxu0 0
        %2099 = vmatprep.subr.bf16.mxu0 0
        %2100 = vmatpush1.bf16.msra.mxu0 0
        %2101 = vmatprep.subr.bf16.mxu0 0
        %2102 = vmatpush1.bf16.msra.mxu0 0
        %2103 = vmatprep.subr.bf16.mxu0 0
        %2104 = vmatpush1.bf16.msra.mxu0 0
        %2105 = vmatprep.subr.bf16.mxu0 0
        %2106 = vmatpush1.bf16.msra.mxu0 0
        %2107 = vmatprep.subr.bf16.mxu0 0
        %2108 = vmatpush1.bf16.msra.mxu0 0
        %2109 = vmatprep.mubr.bf16.mxu0 0
        %2110 = vmatmul.mubr.bf16.gmra.mrb[0].mxu0 %v2072
        %v2111 = vpop.f32.mrb[0].mxu0
        %v2112 = vadd.f32 %v2006, %v2111
        %v2113 = vpop.f32.mrb[0].mxu0
        %v2114 = vpop.f32.mrb[0].mxu0
        %v2115 = vadd.f32 %v2009, %v2114
        %v2116 = vpop.f32.mrb[0].mxu0
        %2117 = vmatprep.mubr.bf16.mxu0 0
        %2118 = vmatmul.mubr.bf16.gmra.mrb[0].mxu0 %v1945
        %v2119 = vpop.f32.mrb[0].mxu0
        %v2120 = vadd.f32 %v2014, %v2119
        %v2121 = vpop.f32.mrb[0].mxu0
        %v2122 = vpop.f32.mrb[0].mxu0
        %v2123 = vadd.f32 %v2017, %v2122
        %v2124 = vpop.f32.mrb[0].mxu0
        %2125 = vmatprep.mubr.bf16.mxu0 0
        %2126 = vmatmul.mubr.bf16.gmra.mrb[0].mxu0 %v1948
        %v2127 = vpop.f32.mrb[0].mxu0
        %v2128 = vadd.f32 %v2022, %v2127
        %v2129 = vpop.f32.mrb[0].mxu0
        %v2130 = vpop.f32.mrb[0].mxu0
        %v2131 = vadd.f32 %v2025, %v2130
        %v2132 = vpop.f32.mrb[0].mxu0
        %2133 = vmatprep.mubr.bf16.mxu0 0
        %2134 = vmatmul.mubr.bf16.gmra.mrb[0].mxu0 %v1951
        %v2135 = vpop.f32.mrb[0].mxu0
        %v2136 = vadd.f32 %v2030, %v2135
        %v2137 = vpop.f32.mrb[0].mxu0
        %v2138 = vpop.f32.mrb[0].mxu0
        %v2139 = vadd.f32 %v2033, %v2138
        %v2140 = vpop.f32.mrb[0].mxu0
        %2141 = vmatprep.mubr.bf16.mxu0 0
        %2142 = vmatmul.mubr.bf16.gmra.mrb[0].mxu0 %v1954
        %v2143 = vpop.f32.mrb[0].mxu0
        %v2144 = vadd.f32 %v2038, %v2143
        %v2145 = vpop.f32.mrb[0].mxu0
        %v2146 = vpop.f32.mrb[0].mxu0
        %v2147 = vadd.f32 %v2041, %v2146
        %v2148 = vpop.f32.mrb[0].mxu0
        %2149 = vmatprep.mubr.bf16.mxu0 0
        %2150 = vmatmul.mubr.bf16.gmra.mrb[0].mxu0 %v1957
        %v2151 = vpop.f32.mrb[0].mxu0
        %v2152 = vadd.f32 %v2046, %v2151
        %v2153 = vpop.f32.mrb[0].mxu0
        %v2154 = vpop.f32.mrb[0].mxu0
        %v2155 = vadd.f32 %v2049, %v2154
        %v2156 = vpop.f32.mrb[0].mxu0
        %2157 = vmatprep.mubr.bf16.mxu0 0
        %2158 = vmatmul.mubr.bf16.gmra.mrb[0].mxu0 %v1960
        %v2159 = vpop.f32.mrb[0].mxu0
        %v2160 = vadd.f32 %v2054, %v2159
        %v2161 = vpop.f32.mrb[0].mxu0
        %v2162 = vpop.f32.mrb[0].mxu0
        %v2163 = vadd.f32 %v2057, %v2162
        %v2164 = vpop.f32.mrb[0].mxu0
        %2165 = vmatprep.mubr.bf16.mxu0 0
        %2166 = vmatmul.mubr.bf16.gmra.mrb[0].mxu0 %v1963
        %v2167 = vpop.f32.mrb[0].mxu0
        %v2168 = vadd.f32 %v2062, %v2167
        %v2169 = vpop.f32.mrb[0].mxu0
        %v2170 = vpop.f32.mrb[0].mxu0
        %v2171 = vadd.f32 %v2065, %v2170
        %v2172 = vpop.f32.mrb[0].mxu0
        %2173 = vdwg.mxu0
        %v2174 = vmax.f32 %v2112, 0.0
        %v2175 = vmax.f32 %v2115, 0.0
        %v2176 = vmax.f32 %v2120, 0.0
        %v2177 = vmax.f32 %v2123, 0.0
        %v2178 = vmax.f32 %v2128, 0.0
        %v2179 = vmax.f32 %v2131, 0.0
        %v2180 = vmax.f32 %v2136, 0.0
        %v2181 = vmax.f32 %v2139, 0.0
        %v2182 = vmax.f32 %v2144, 0.0
        %v2183 = vmax.f32 %v2147, 0.0
        %v2184 = vmax.f32 %v2152, 0.0
        %v2185 = vmax.f32 %v2155, 0.0
        %v2186 = vmax.f32 %v2160, 0.0
        %v2187 = vmax.f32 %v2163, 0.0
        %v2188 = vmax.f32 %v2168, 0.0
        %v2189 = vmax.f32 %v2171, 0.0
        %v2190 = vpack.c.bf16 %v2175, %v2174
        %v2191 = vpack.c.bf16 %v2177, %v2176
        %v2192 = vpack.c.bf16 %v2179, %v2178
        %v2193 = vpack.c.bf16 %v2181, %v2180
        %v2194 = vpack.c.bf16 %v2183, %v2182
        %v2195 = vpack.c.bf16 %v2185, %v2184
        %v2196 = vpack.c.bf16 %v2187, %v2186
        %v2197 = vpack.c.bf16 %v2189, %v2188
        %v2206 = vunpack.c.l.b16 %v2190
        %v2207 = vunpack.c.h.b16 %v2190
        %v2208 = vunpack.c.l.b16 %v2191
        %v2209 = vunpack.c.h.b16 %v2191
        %v2210 = vunpack.c.l.b16 %v2192
        %v2211 = vunpack.c.h.b16 %v2192
        %v2212 = vunpack.c.l.b16 %v2193
        %v2213 = vunpack.c.h.b16 %v2193
        %v2214 = vunpack.c.l.b16 %v2194
        %v2215 = vunpack.c.h.b16 %v2194
        %v2216 = vunpack.c.l.b16 %v2195
        %v2217 = vunpack.c.h.b16 %v2195
        %v2218 = vunpack.c.l.b16 %v2196
        %v2219 = vunpack.c.h.b16 %v2196
        %v2220 = vunpack.c.l.b16 %v2197
        %v2221 = vunpack.c.h.b16 %v2197
        %v2222 = vpack.c.b16 %v2206, %v2206
        %v2223 = vpack.c.b16 %v2207, %v2207
        %v2224 = vpack.c.b16 %v2208, %v2208
        %v2225 = vpack.c.b16 %v2209, %v2209
        %v2226 = vpack.c.b16 %v2210, %v2210
        %v2227 = vpack.c.b16 %v2211, %v2211
        %v2228 = vpack.c.b16 %v2212, %v2212
        %v2229 = vpack.c.b16 %v2213, %v2213
        %v2230 = vpack.c.b16 %v2214, %v2214
        %v2231 = vpack.c.b16 %v2215, %v2215
        %v2232 = vpack.c.b16 %v2216, %v2216
        %v2233 = vpack.c.b16 %v2217, %v2217
        %v2234 = vpack.c.b16 %v2218, %v2218
        %v2235 = vpack.c.b16 %v2219, %v2219
        %v2236 = vpack.c.b16 %v2220, %v2220
        %v2237 = vpack.c.b16 %v2221, %v2221
        %2238 = vrot.lane.b32.xlu0 %v2222, 8
        %v2239 = vpop.permute.xlu0 %2238
        %2240 = vrot.lane.b32.xlu0 %v2223, 8
        %v2241 = vpop.permute.xlu0 %2240
        %2242 = vrot.lane.b32.xlu0 %v2224, 8
        %v2243 = vpop.permute.xlu0 %2242
        %2244 = vrot.lane.b32.xlu0 %v2225, 8
        %v2245 = vpop.permute.xlu0 %2244
        %2246 = vrot.lane.b32.xlu0 %v2226, 8
        %v2247 = vpop.permute.xlu0 %2246
        %2248 = vrot.lane.b32.xlu0 %v2227, 8
        %v2249 = vpop.permute.xlu0 %2248
        %2250 = vrot.lane.b32.xlu0 %v2228, 8
        %v2251 = vpop.permute.xlu0 %2250
        %2252 = vrot.lane.b32.xlu0 %v2229, 8
        %v2253 = vpop.permute.xlu0 %2252
        %2254 = vrot.lane.b32.xlu0 %v2230, 8
        %v2255 = vpop.permute.xlu0 %2254
        %2256 = vrot.lane.b32.xlu0 %v2231, 8
        %v2257 = vpop.permute.xlu0 %2256
        %2258 = vrot.lane.b32.xlu0 %v2232, 8
        %v2259 = vpop.permute.xlu0 %2258
        %2260 = vrot.lane.b32.xlu0 %v2233, 8
        %v2261 = vpop.permute.xlu0 %2260
        %2262 = vrot.lane.b32.xlu0 %v2234, 8
        %v2263 = vpop.permute.xlu0 %2262
        %2264 = vrot.lane.b32.xlu0 %v2235, 8
        %v2265 = vpop.permute.xlu0 %2264
        %2266 = vrot.lane.b32.xlu0 %v2236, 8
        %v2267 = vpop.permute.xlu0 %2266
        %2268 = vrot.lane.b32.xlu0 %v2237, 8
        %v2269 = vpop.permute.xlu0 %2268
        %2286 = vst.msk [vmem:[%s1890] sm:$0xf] %vm1553, %v2239
        %2287 = vst.msk [vmem:[%s1890 + $0x4] sm:$0xf] %vm1553, %v2241
        %2288 = vst.msk [vmem:[%s1890 + $0x10] sm:$0xf] %vm1553, %v2243
        %2289 = vst.msk [vmem:[%s1890 + $0x14] sm:$0xf] %vm1553, %v2245
        %2290 = vst.msk [vmem:[%s1890 + $0x20] sm:$0xf] %vm1553, %v2247
        %2291 = vst.msk [vmem:[%s1890 + $0x24] sm:$0xf] %vm1553, %v2249
        %2292 = vst.msk [vmem:[%s1890 + $0x30] sm:$0xf] %vm1553, %v2251
        %2293 = vst.msk [vmem:[%s1890 + $0x34] sm:$0xf] %vm1553, %v2253
        %2294 = vst.msk [vmem:[%s1890 + $0x40] sm:$0xf] %vm1553, %v2255
        %2295 = vst.msk [vmem:[%s1890 + $0x44] sm:$0xf] %vm1553, %v2257
        %2296 = vst.msk [vmem:[%s1890 + $0x50] sm:$0xf] %vm1553, %v2259
        %2297 = vst.msk [vmem:[%s1890 + $0x54] sm:$0xf] %vm1553, %v2261
        %2298 = vst.msk [vmem:[%s1890 + $0x60] sm:$0xf] %vm1553, %v2263
        %2299 = vst.msk [vmem:[%s1890 + $0x64] sm:$0xf] %vm1553, %v2265
        %2300 = vst.msk [vmem:[%s1890 + $0x70] sm:$0xf] %vm1553, %v2267
        %2301 = vst.msk [vmem:[%s1890 + $0x74] sm:$0xf] %vm1553, %v2269
        %s2302 = sand.u32 %s89, 1
        %s2303 = scalar_lea.sflag [#allocation5], %s2302
        %s2304 = sand.u32 %s89, 1
        %s2305 = smul.addr %s2304, 128
        %s2306 = scalar_lea.vmem [#allocation8], %s2305
        // Predicated region
        $region37: #{upblock_forward.1} parent=27 // pred_check
          %p2307 = pneg %p99
        $region38: #{upblock_forward.1} parent=27 // pred_check_branch
          %2309 = sbr.rel (%p2307) target = $region40
        $region39: #{upblock_forward.1} parent=27 // pred_region
          %s2310 = smul.u32 8, %s25
          %s2312 = ssub.s32 2048, 2048
          %2313 = vsyncadd %s2303, %s2312
          %s2314 = smul.addr %s2310, 4
          %s2315 = smul.addr %s24, 64
          %s2316 = sadd.s32 %s2314, %s2315
          %s2317 = smul.addr %s2316, 64
          %s2318 = scalar_lea.hbm %s2, %s2317
          %s2319 = sshll.u32 %s2306, 4
          %s2320 = int_to_ptr.vmem [resolvable:$true] %s2319
          %2325 = dma.vmem_to_hbm [thread:$0]  %s2320, 2048, %s2318, %s2303, 64, 64, 4
        $region40: #{upblock_forward.1} parent=27 // pred_fallthru
          _
      $region28: #{upblock_forward.1} parent=5 // pred_fallthru
        _
      %p2326 = scmp.le.s32.totalorder 2, %s15
      // Predicated region
      $region41: #{upblock_forward.1} parent=5 // pred_check
        %p2327 = pneg %p2326
      $region42: #{upblock_forward.1} parent=5 // pred_check_branch
        %2329 = sbr.rel (%p2327) target = $region44
      $region43: #{upblock_forward.1} parent=5 // pred_region
        %s2330 = ssub.s32 %s15, 2
        // Predicated region
        $region45: #{upblock_forward.1} parent=43 // pred_check
          %p2331 = pneg %p105
        $region46: #{upblock_forward.1} parent=43 // pred_check_branch
          %2333 = sbr.rel (%p2331) target = $region48
        $region47: #{upblock_forward.1} parent=43 // pred_region
          %s2334 = sand.u32 %s90, 1
          %s2335 = scalar_lea.sflag [#allocation5], %s2334
          %s2336 = sand.u32 %s90, 1
          %s2337 = smul.addr %s2336, 128
          %s2338 = scalar_lea.vmem [#allocation8], %s2337
          %2339 = dma.done %s2335, 2048
        $region48: #{upblock_forward.1} parent=43 // pred_fallthru
          _
      $region44: #{upblock_forward.1} parent=5 // pred_fallthru
        _
    $region6: #{upblock_forward.1} parent=1 // loop_footer
      %s19 = sadd.s32 1, %s15
    $region7: #{upblock_forward.1} parent=1 // loop_footer_branch
      %14 = sbr.rel target = $region3
    $region8: #{upblock_forward.1} parent=1 // loop_exit
      _
    %2340 = vsyncpa [#allocation4], 1
    %s2341 = scalar_lea.sflag [#allocation4], 1
    %2342 = vsyncpa %s2341, 1
    %2343 = vsyncpa [#allocation7], 1
    %2344 = vsyncpa [#allocation5], 1
    %s2345 = scalar_lea.sflag [#allocation5], 1
    %2346 = vsyncpa %s2345, 1

</llo_original>
